<compile_context>
chip_gen: v7x
topology: tpu7x:2x2x1
jax: 0.10.0
libtpu: 0.0.40
codegen_flags: <defaults>
</compile_context>

<pallas_src>
import functools

import jax
import jax.numpy as jnp
from jax.experimental import pallas as pl
from jax.experimental.pallas import tpu as pltpu


# ----------------------------------------------------------------------------
# helpers
# ----------------------------------------------------------------------------
def _pick_g_tile(G, per_g_bytes, target_bytes=2 << 20):
    """Largest divisor tG of G with (tG % 8 == 0 or tG == G) whose block fits."""
    cands = [d for d in range(G, 0, -1) if G % d == 0 and (d % 8 == 0 or d == G)]
    for d in cands:
        if d * per_g_bytes <= target_bytes:
            return d
    return cands[-1]


def _sum11(x):
    """Sum of all elements of x as a (1, 1) f32 array."""
    s = jnp.sum(x, axis=tuple(range(x.ndim)), keepdims=True)
    return s.reshape(1, 1)


# ----------------------------------------------------------------------------
# Kernel 1: tiled global unbiased (ddof=1) std of the centered features/coords.
#   grid = (B, G//tG), both "arbitrary" (sequential accumulation into scratch).
# ----------------------------------------------------------------------------
def _std_kernel(lc_x_ref, knn_x_ref, lc_xyz_ref, knn_xyz_ref,
                std_x_ref, std_xyz_ref,
                sx_ref, ssx_ref, sz_ref, ssz_ref, *, n_x, n_xyz):
    b = pl.program_id(0)
    g = pl.program_id(1)
    is_first = jnp.logical_and(b == 0, g == 0)
    is_last = jnp.logical_and(b == pl.num_programs(0) - 1,
                              g == pl.num_programs(1) - 1)

    @pl.when(is_first)
    def _():
        sx_ref[...] = jnp.zeros_like(sx_ref)
        ssx_ref[...] = jnp.zeros_like(ssx_ref)
        sz_ref[...] = jnp.zeros_like(sz_ref)
        ssz_ref[...] = jnp.zeros_like(ssz_ref)

    cx = knn_x_ref[...] - lc_x_ref[...][:, :, None, :]        # (1, tG, K, C)
    cz = knn_xyz_ref[...] - lc_xyz_ref[...][:, :, None, :]    # (1, tG, K, 3)
    sx_ref[...] += _sum11(cx)
    ssx_ref[...] += _sum11(cx * cx)
    sz_ref[...] += _sum11(cz)
    ssz_ref[...] += _sum11(cz * cz)

    @pl.when(is_last)
    def _():
        var_x = (ssx_ref[...] - sx_ref[...] * sx_ref[...] * (1.0 / n_x)) * (1.0 / (n_x - 1.0))
        var_z = (ssz_ref[...] - sz_ref[...] * sz_ref[...] * (1.0 / n_xyz)) * (1.0 / (n_xyz - 1.0))
        std_x_ref[...] = jnp.sqrt(var_x)
        std_xyz_ref[...] = jnp.sqrt(var_z)


def compute_centered_stds(lc_xyz, lc_x, knn_xyz, knn_x, *, g_tile=None):
    """Returns (std_x, std_xyz) as (1,1) f32 arrays (unbiased, over all elems)."""
    B, G, K, C = knn_x.shape
    if g_tile is None:
        per_g_bytes = 4 * K * (C + 3) * 3
        g_tile = _pick_g_tile(G, per_g_bytes)
    assert G % g_tile == 0 and (g_tile % 8 == 0 or g_tile == G)
    nG = G // g_tile
    n_x = float(B * G * K * C)
    n_xyz = float(B * G * K * 3)

    kern = functools.partial(_std_kernel, n_x=n_x, n_xyz=n_xyz)
    std_x, std_xyz = pl.pallas_call(
        kern,
        grid=(B, nG),
        in_specs=[
            pl.BlockSpec((1, g_tile, C), lambda b, g: (b, g, 0)),          # lc_x
            pl.BlockSpec((1, g_tile, K, C), lambda b, g: (b, g, 0, 0)),    # knn_x
            pl.BlockSpec((1, g_tile, 3), lambda b, g: (b, g, 0)),          # lc_xyz
            pl.BlockSpec((1, g_tile, K, 3), lambda b, g: (b, g, 0, 0)),    # knn_xyz
        ],
        out_specs=(pl.BlockSpec((1, 1), lambda b, g: (0, 0)),
                   pl.BlockSpec((1, 1), lambda b, g: (0, 0))),
        out_shape=(jax.ShapeDtypeStruct((1, 1), jnp.float32),
                   jax.ShapeDtypeStruct((1, 1), jnp.float32)),
        scratch_shapes=[pltpu.VMEM((1, 1), jnp.float32)] * 4,
        compiler_params=pltpu.CompilerParams(
            dimension_semantics=("arbitrary", "arbitrary")),
    )(lc_x, knn_x, lc_xyz, knn_xyz)
    return std_x, std_xyz


# ----------------------------------------------------------------------------
# Kernel 2: fused normalize + PosE_Geo + (x + pe) * pe, tiled over (B, G//tG).
#   PosE channel layout (matches PyTorch permute/reshape):
#     channel c -> coord d = c // (2*fd), freq j = (c % (2*fd)) // 2,
#     sin if c even else cos.  cos is realized as sin(arg + pi/2) via a phase
#     table, so only out_dim transcendentals are issued per point.
# ----------------------------------------------------------------------------
def _lga_kernel(inv_std_x_ref, freq_ref, phase_ref,
                lc_x_ref, knn_x_ref, lc_xyz_ref, knn_xyz_ref,
                out_ref, *, feat_dim, C):
    two_fd = 2 * feat_dim

    # ---- pass 1: positional embedding written per-coordinate into out_ref ---
    knn_xyz = knn_xyz_ref[...]                          # (1, tG, K, 3)
    lc_xyz = lc_xyz_ref[...]                            # (1, tG, 3)
    freq_b = freq_ref[...].reshape(1, 1, 1, two_fd)     # hoisted broadcasts
    phase_b = phase_ref[...].reshape(1, 1, 1, two_fd)
    for d in range(3):                                  # static trip count
        cz_d = knn_xyz[:, :, :, d:d + 1] - lc_xyz[:, :, None, d:d + 1]  # (1,tG,K,1)
        arg = cz_d * freq_b + phase_b                   # (1, tG, K, 2*fd)
        out_ref[:, :, :, d * two_fd:(d + 1) * two_fd] = jnp.sin(arg).astype(out_ref.dtype)

    # ---- pass 2: (feat + pe) * pe over the two C-wide channel halves --------
    inv_std_x = inv_std_x_ref[0]                        # SMEM scalar
    lc_x = lc_x_ref[...]                                # (1, tG, C)
    knn_x = knn_x_ref[...]                              # (1, tG, K, C)
    mean_x = lc_x[:, :, None, :]                        # (1, tG, 1, C)

    pe_lo = out_ref[:, :, :, 0:C]
    out_ref[:, :, :, 0:C] = (((knn_x - mean_x) * inv_std_x + pe_lo) * pe_lo
                             ).astype(out_ref.dtype)
    pe_hi = out_ref[:, :, :, C:2 * C]
    out_ref[:, :, :, C:2 * C] = ((mean_x + pe_hi) * pe_hi).astype(out_ref.dtype)


# ----------------------------------------------------------------------------
# Wrapper
# ----------------------------------------------------------------------------
def lga_forward(lc_xyz, lc_x, knn_xyz, knn_x, *, out_dim, alpha, beta,
                g_tile=None):
    B, G, K, C = knn_x.shape
    assert out_dim == 2 * C, "PosE_Geo requires out_dim == 2 * C"
    assert out_dim % 6 == 0, "out_dim must be divisible by 2 * in_dim (= 6)"
    feat_dim = out_dim // 6
    two_fd = 2 * feat_dim

    if g_tile is None:
        # one copy of (out + knn_x + knn_xyz) per G row, x3 fudge for
        # double-buffering + in-kernel temporaries; stays well inside the
        # default scoped-VMEM limit on every generation (incl. v7x's 64 MiB).
        per_g_bytes = 4 * K * (out_dim + C + 3) * 3
        g_tile = _pick_g_tile(G, per_g_bytes, target_bytes=2 << 20)
    assert G % g_tile == 0 and (g_tile % 8 == 0 or g_tile == G)
    nG = G // g_tile

    # ---- kernel 1: tiled global reduction for the two stds ----
    std_x, std_xyz = compute_centered_stds(lc_xyz, lc_x, knn_xyz, knn_x,
                                           g_tile=g_tile)

    # ---- constant tables: fold beta, std_xyz and dim_embed into reciprocal
    #      multipliers so the hot kernel does no divides ----
    inv_std_x = (1.0 / (std_x + 1e-5)).reshape(1).astype(jnp.float32)   # (1,) SMEM
    inv_std_xyz = (1.0 / (std_xyz + 1e-5)).reshape(())
    feat_range = jnp.arange(feat_dim, dtype=jnp.float32)
    dim_embed = jnp.power(jnp.float32(alpha), feat_range / feat_dim)    # (fd,)
    freq_1d = (jnp.float32(beta) * inv_std_xyz) / dim_embed             # (fd,)
    freq = jnp.repeat(freq_1d, 2).reshape(1, two_fd)                    # [f0,f0,f1,f1,...]
    phase = jnp.tile(jnp.array([0.0, jnp.pi / 2], jnp.float32),
                     feat_dim).reshape(1, two_fd)                       # sin / cos phases

    # ---- kernel 2: fused elementwise hot path, tiled over (B, G) ----
    kern = functools.partial(_lga_kernel, feat_dim=feat_dim, C=C)
    out = pl.pallas_call(
        kern,
        grid=(B, nG),
        in_specs=[
            pl.BlockSpec(memory_space=pltpu.MemorySpace.SMEM),             # inv_std_x (1,)
            pl.BlockSpec((1, two_fd), lambda b, g: (0, 0)),                # freq table
            pl.BlockSpec((1, two_fd), lambda b, g: (0, 0)),                # phase table
            pl.BlockSpec((1, g_tile, C), lambda b, g: (b, g, 0)),          # lc_x
            pl.BlockSpec((1, g_tile, K, C), lambda b, g: (b, g, 0, 0)),    # knn_x
            pl.BlockSpec((1, g_tile, 3), lambda b, g: (b, g, 0)),          # lc_xyz
            pl.BlockSpec((1, g_tile, K, 3), lambda b, g: (b, g, 0, 0)),    # knn_xyz
        ],
        out_specs=pl.BlockSpec((1, g_tile, K, out_dim), lambda b, g: (b, g, 0, 0)),
        out_shape=jax.ShapeDtypeStruct((B, G, K, out_dim), jnp.float32),
        compiler_params=pltpu.CompilerParams(
            dimension_semantics=("parallel", "parallel"),
            vmem_limit_bytes=32 * 1024 * 1024),
    )(inv_std_x, freq, phase, lc_x, knn_x, lc_xyz, knn_xyz)
    # TODO(synk): consider emitting the NCHW (B, out_dim, G*K) lane-dense layout
    # directly to remove the consumer-side transpose.
    return out  # (B, G, K, out_dim) channels-last


# ----------------------------------------------------------------------------
# Pure-JAX replica of the PyTorch forward (NCHW output) for verification.
# ----------------------------------------------------------------------------
def reference_lga(lc_xyz, lc_x, knn_xyz, knn_x, out_dim, alpha, beta,
                  std_x=None, std_xyz=None):
    mean_x = lc_x[:, :, None, :]
    if std_x is None:
        std_x = jnp.std(knn_x - mean_x, ddof=1)
    mean_xyz = lc_xyz[:, :, None, :]
    if std_xyz is None:
        std_xyz = jnp.std(knn_xyz - mean_xyz, ddof=1)
    knn_x_n = (knn_x - mean_x) / (std_x + 1e-5)
    knn_xyz_n = (knn_xyz - mean_xyz) / (std_xyz + 1e-5)
    B, G, K, C = knn_x.shape
    knn_x_cat = jnp.concatenate(
        [knn_x_n, jnp.broadcast_to(mean_x, knn_x.shape)], axis=-1)
    knn_xyz_p = jnp.transpose(knn_xyz_n, (0, 3, 1, 2))   # (B, 3, G, K)
    knn_x_p = jnp.transpose(knn_x_cat, (0, 3, 1, 2))     # (B, 2C, G, K)
    fd = out_dim // 6
    feat_range = jnp.arange(fd, dtype=jnp.float32)
    dim_embed = jnp.power(jnp.float32(alpha), feat_range / fd)
    div = (beta * knn_xyz_p[..., None]) / dim_embed      # (B, 3, G, K, fd)
    sin_e, cos_e = jnp.sin(div), jnp.cos(div)
    pe = jnp.stack([sin_e, cos_e], axis=5).reshape(B, 3, G, K, 2 * fd)
    pe = jnp.transpose(pe, (0, 1, 4, 2, 3)).reshape(B, out_dim, G, K)
    return (knn_x_p + pe) * pe


if __name__ == "__main__":
    key = jax.random.PRNGKey(0)
    B, G, K, C = 2, 64, 16, 24
    out_dim = 2 * C            # 48 -> feat_dim = 8
    alpha, beta = 1000.0, 100.0

    k1, k2, k3, k4 = jax.random.split(key, 4)
    lc_xyz = jax.random.normal(k1, (B, G, 3), dtype=jnp.float32)
    lc_x = jax.random.normal(k2, (B, G, C), dtype=jnp.float32)
    knn_xyz = lc_xyz[:, :, None, :] + 0.1 * jax.random.normal(
        k3, (B, G, K, 3), dtype=jnp.float32)
    knn_x = jax.random.normal(k4, (B, G, K, C), dtype=jnp.float32)

    # Force g_tile=16 so the multi-tile G grid path (nG = 4) is exercised.
    out = lga_forward(lc_xyz, lc_x, knn_xyz, knn_x,
                      out_dim=out_dim, alpha=alpha, beta=beta, g_tile=16)
    out = jax.block_until_ready(out)
    assert out.shape == (B, G, K, out_dim), out.shape

    # 1) tiled std-reduction kernel vs jnp.std (ddof=1)
    std_x_k, std_xyz_k = compute_centered_stds(lc_xyz, lc_x, knn_xyz, knn_x,
                                               g_tile=16)
    std_x_ref = jnp.std(knn_x - lc_x[:, :, None, :], ddof=1)
    std_xyz_ref = jnp.std(knn_xyz - lc_xyz[:, :, None, :], ddof=1)
    assert abs(float(std_x_k[0, 0]) - float(std_x_ref)) < 1e-3 * float(std_x_ref)
    assert abs(float(std_xyz_k[0, 0]) - float(std_xyz_ref)) < 1e-3 * float(std_xyz_ref)

    # 2) fused elementwise path vs the jnp reference evaluated with the SAME
    #    stds.  (sin(beta * x / dim_embed) at |arg| ~ 400 amplifies last-ulp
    #    differences in the f32 std reduction, so the end-to-end check is
    #    decomposed into (1) + (2) to stay tight without being flaky.)
    ref = reference_lga(lc_xyz, lc_x, knn_xyz, knn_x, out_dim, alpha, beta,
                        std_x=std_x_k[0, 0], std_xyz=std_xyz_k[0, 0])
    ref_cl = jnp.transpose(ref, (0, 2, 3, 1))   # NCHW -> channels-last
    max_err = float(jnp.max(jnp.abs(out - ref_cl)))
    assert jnp.allclose(out, ref_cl, atol=2e-3, rtol=2e-3), max_err

    print("KERNEL_OK")
</pallas_src>

<mosaic_0001>
module attributes {stable_mosaic.version = 11 : i64} {
  func.func @_std_kernel(%arg0: i32, %arg1: i32, %arg2: memref<1x16x24xf32, #tpu.memory_space<vmem>>, %arg3: memref<1x16x16x24xf32, #tpu.memory_space<vmem>>, %arg4: memref<1x16x3xf32, #tpu.memory_space<vmem>>, %arg5: memref<1x16x16x3xf32, #tpu.memory_space<vmem>>, %arg6: memref<1x1xf32, #tpu.memory_space<vmem>>, %arg7: memref<1x1xf32, #tpu.memory_space<vmem>>, %arg8: memref<1x1xf32, #tpu.memory_space<vmem>>, %arg9: memref<1x1xf32, #tpu.memory_space<vmem>>, %arg10: memref<1x1xf32, #tpu.memory_space<vmem>>, %arg11: memref<1x1xf32, #tpu.memory_space<vmem>>) attributes {dimension_semantics = [#tpu.dimension_semantics<arbitrary>, #tpu.dimension_semantics<arbitrary>], iteration_bounds = array<i64: 2, 4>, scalar_prefetch = 0 : i64, scratch_operands = 4 : i64, tpu.core_type = #tpu.core_type<tc>, window_params = [{transform_indices = @transform_0, window_bounds = array<i64: 1, 16, 24>}, {transform_indices = @transform_1, window_bounds = array<i64: 1, 16, 16, 24>}, {transform_indices = @transform_2, window_bounds = array<i64: 1, 16, 3>}, {transform_indices = @transform_3, window_bounds = array<i64: 1, 16, 16, 3>}, {pipeline_mode = #tpu.pipeline_mode<synchronous>, transform_indices = @transform_4, window_bounds = array<i64: 1, 1>}, {pipeline_mode = #tpu.pipeline_mode<synchronous>, transform_indices = @transform_5, window_bounds = array<i64: 1, 1>}]} {
    %c0_i32 = arith.constant 0 : i32
    %0 = arith.cmpi eq, %arg0, %c0_i32 : i32
    %c0_i32_0 = arith.constant 0 : i32
    %1 = arith.cmpi eq, %arg1, %c0_i32_0 : i32
    %2 = arith.andi %0, %1 : i1
    %c1_i32 = arith.constant 1 : i32
    %3 = arith.cmpi eq, %arg0, %c1_i32 : i32
    %c3_i32 = arith.constant 3 : i32
    %4 = arith.cmpi eq, %arg1, %c3_i32 : i32
    %5 = arith.andi %3, %4 : i1
    %6 = arith.extui %2 : i1 to i32
    %c0_i32_1 = arith.constant 0 : i32
    %7 = arith.cmpi ne, %6, %c0_i32_1 : i32
    scf.if %7 {
      %cst_35 = arith.constant 0.000000e+00 : f32
      %58 = vector.broadcast %cst_35 : f32 to vector<1x1xf32>
      %c0_36 = arith.constant 0 : index
      %c0_37 = arith.constant 0 : index
      %59 = vector.load %arg8[%c0_36, %c0_37] : memref<1x1xf32, #tpu.memory_space<vmem>>, vector<1x1xf32>
      tpu.vector_store %arg8[%c0_36, %c0_37], %58 {strides = array<i32>} : memref<1x1xf32, #tpu.memory_space<vmem>>, vector<1x1xf32>,
      %cst_38 = arith.constant 0.000000e+00 : f32
      %60 = vector.broadcast %cst_38 : f32 to vector<1x1xf32>
      %c0_39 = arith.constant 0 : index
      %c0_40 = arith.constant 0 : index
      %61 = vector.load %arg9[%c0_39, %c0_40] : memref<1x1xf32, #tpu.memory_space<vmem>>, vector<1x1xf32>
      tpu.vector_store %arg9[%c0_39, %c0_40], %60 {strides = array<i32>} : memref<1x1xf32, #tpu.memory_space<vmem>>, vector<1x1xf32>,
      %cst_41 = arith.constant 0.000000e+00 : f32
      %62 = vector.broadcast %cst_41 : f32 to vector<1x1xf32>
      %c0_42 = arith.constant 0 : index
      %c0_43 = arith.constant 0 : index
      %63 = vector.load %arg10[%c0_42, %c0_43] : memref<1x1xf32, #tpu.memory_space<vmem>>, vector<1x1xf32>
      tpu.vector_store %arg10[%c0_42, %c0_43], %62 {strides = array<i32>} : memref<1x1xf32, #tpu.memory_space<vmem>>, vector<1x1xf32>,
      %cst_44 = arith.constant 0.000000e+00 : f32
      %64 = vector.broadcast %cst_44 : f32 to vector<1x1xf32>
      %c0_45 = arith.constant 0 : index
      %c0_46 = arith.constant 0 : index
      %65 = vector.load %arg11[%c0_45, %c0_46] : memref<1x1xf32, #tpu.memory_space<vmem>>, vector<1x1xf32>
      tpu.vector_store %arg11[%c0_45, %c0_46], %64 {strides = array<i32>} : memref<1x1xf32, #tpu.memory_space<vmem>>, vector<1x1xf32>,
    } else {
    }
    %c0 = arith.constant 0 : index
    %c0_2 = arith.constant 0 : index
    %c0_3 = arith.constant 0 : index
    %c0_4 = arith.constant 0 : index
    %8 = vector.load %arg3[%c0, %c0_2, %c0_3, %c0_4] : memref<1x16x16x24xf32, #tpu.memory_space<vmem>>, vector<1x16x16x24xf32>
    %c0_5 = arith.constant 0 : index
    %c0_6 = arith.constant 0 : index
    %c0_7 = arith.constant 0 : index
    %9 = vector.load %arg2[%c0_5, %c0_6, %c0_7] : memref<1x16x24xf32, #tpu.memory_space<vmem>>, vector<1x16x24xf32>
    %10 = vector.shape_cast %9 : vector<1x16x24xf32> to vector<1x16x1x24xf32>
    %11 = vector.broadcast %10 : vector<1x16x1x24xf32> to vector<1x16x16x24xf32>
    %12 = arith.subf %8, %11 : vector<1x16x16x24xf32>
    %c0_8 = arith.constant 0 : index
    %c0_9 = arith.constant 0 : index
    %c0_10 = arith.constant 0 : index
    %c0_11 = arith.constant 0 : index
    %13 = vector.load %arg5[%c0_8, %c0_9, %c0_10, %c0_11] : memref<1x16x16x3xf32, #tpu.memory_space<vmem>>, vector<1x16x16x3xf32>
    %c0_12 = arith.constant 0 : index
    %c0_13 = arith.constant 0 : index
    %c0_14 = arith.constant 0 : index
    %14 = vector.load %arg4[%c0_12, %c0_13, %c0_14] : memref<1x16x3xf32, #tpu.memory_space<vmem>>, vector<1x16x3xf32>
    %15 = vector.shape_cast %14 : vector<1x16x3xf32> to vector<1x16x1x3xf32>
    %16 = vector.broadcast %15 : vector<1x16x1x3xf32> to vector<1x16x16x3xf32>
    %17 = arith.subf %13, %16 : vector<1x16x16x3xf32>
    %c0_15 = arith.constant 0 : index
    %c0_16 = arith.constant 0 : index
    %18 = vector.load %arg8[%c0_15, %c0_16] : memref<1x1xf32, #tpu.memory_space<vmem>>, vector<1x1xf32>
    %19 = vector.shape_cast %12 : vector<1x16x16x24xf32> to vector<1x1x16x16x24xf32>
    %cst = arith.constant dense<0.000000e+00> : vector<1xf32>
    %20 = vector.multi_reduction <add>, %19, %cst [1, 2, 3, 4] : vector<1x1x16x16x24xf32> to vector<1xf32>
    %21 = vector.shape_cast %20 : vector<1xf32> to vector<1x1x1x1x1xf32>
    %22 = vector.extract %21[0, 0, 0, 0, 0] : f32 from vector<1x1x1x1x1xf32>
    %23 = vector.broadcast %22 : f32 to vector<1x1x1x1xf32>
    %24 = vector.shape_cast %23 : vector<1x1x1x1xf32> to vector<1x1xf32>
    %25 = arith.addf %18, %24 : vector<1x1xf32>
    %c0_17 = arith.constant 0 : index
    %c0_18 = arith.constant 0 : index
    %26 = vector.load %arg8[%c0_17, %c0_18] : memref<1x1xf32, #tpu.memory_space<vmem>>, vector<1x1xf32>
    tpu.vector_store %arg8[%c0_17, %c0_18], %25 {strides = array<i32>} : memref<1x1xf32, #tpu.memory_space<vmem>>, vector<1x1xf32>,
    %c0_19 = arith.constant 0 : index
    %c0_20 = arith.constant 0 : index
    %27 = vector.load %arg9[%c0_19, %c0_20] : memref<1x1xf32, #tpu.memory_space<vmem>>, vector<1x1xf32>
    %28 = arith.mulf %12, %12 : vector<1x16x16x24xf32>
    %29 = vector.shape_cast %28 : vector<1x16x16x24xf32> to vector<1x1x16x16x24xf32>
    %cst_21 = arith.constant dense<0.000000e+00> : vector<1xf32>
    %30 = vector.multi_reduction <add>, %29, %cst_21 [1, 2, 3, 4] : vector<1x1x16x16x24xf32> to vector<1xf32>
    %31 = vector.shape_cast %30 : vector<1xf32> to vector<1x1x1x1x1xf32>
    %32 = vector.extract %31[0, 0, 0, 0, 0] : f32 from vector<1x1x1x1x1xf32>
    %33 = vector.broadcast %32 : f32 to vector<1x1x1x1xf32>
    %34 = vector.shape_cast %33 : vector<1x1x1x1xf32> to vector<1x1xf32>
    %35 = arith.addf %27, %34 : vector<1x1xf32>
    %c0_22 = arith.constant 0 : index
    %c0_23 = arith.constant 0 : index
    %36 = vector.load %arg9[%c0_22, %c0_23] : memref<1x1xf32, #tpu.memory_space<vmem>>, vector<1x1xf32>
    tpu.vector_store %arg9[%c0_22, %c0_23], %35 {strides = array<i32>} : memref<1x1xf32, #tpu.memory_space<vmem>>, vector<1x1xf32>,
    %c0_24 = arith.constant 0 : index
    %c0_25 = arith.constant 0 : index
    %37 = vector.load %arg10[%c0_24, %c0_25] : memref<1x1xf32, #tpu.memory_space<vmem>>, vector<1x1xf32>
    %38 = vector.shape_cast %17 : vector<1x16x16x3xf32> to vector<1x1x16x16x3xf32>
    %cst_26 = arith.constant dense<0.000000e+00> : vector<1xf32>
    %39 = vector.multi_reduction <add>, %38, %cst_26 [1, 2, 3, 4] : vector<1x1x16x16x3xf32> to vector<1xf32>
    %40 = vector.shape_cast %39 : vector<1xf32> to vector<1x1x1x1x1xf32>
    %41 = vector.extract %40[0, 0, 0, 0, 0] : f32 from vector<1x1x1x1x1xf32>
    %42 = vector.broadcast %41 : f32 to vector<1x1x1x1xf32>
    %43 = vector.shape_cast %42 : vector<1x1x1x1xf32> to vector<1x1xf32>
    %44 = arith.addf %37, %43 : vector<1x1xf32>
    %c0_27 = arith.constant 0 : index
    %c0_28 = arith.constant 0 : index
    %45 = vector.load %arg10[%c0_27, %c0_28] : memref<1x1xf32, #tpu.memory_space<vmem>>, vector<1x1xf32>
    tpu.vector_store %arg10[%c0_27, %c0_28], %44 {strides = array<i32>} : memref<1x1xf32, #tpu.memory_space<vmem>>, vector<1x1xf32>,
    %c0_29 = arith.constant 0 : index
    %c0_30 = arith.constant 0 : index
    %46 = vector.load %arg11[%c0_29, %c0_30] : memref<1x1xf32, #tpu.memory_space<vmem>>, vector<1x1xf32>
    %47 = arith.mulf %17, %17 : vector<1x16x16x3xf32>
    %48 = vector.shape_cast %47 : vector<1x16x16x3xf32> to vector<1x1x16x16x3xf32>
    %cst_31 = arith.constant dense<0.000000e+00> : vector<1xf32>
    %49 = vector.multi_reduction <add>, %48, %cst_31 [1, 2, 3, 4] : vector<1x1x16x16x3xf32> to vector<1xf32>
    %50 = vector.shape_cast %49 : vector<1xf32> to vector<1x1x1x1x1xf32>
    %51 = vector.extract %50[0, 0, 0, 0, 0] : f32 from vector<1x1x1x1x1xf32>
    %52 = vector.broadcast %51 : f32 to vector<1x1x1x1xf32>
    %53 = vector.shape_cast %52 : vector<1x1x1x1xf32> to vector<1x1xf32>
    %54 = arith.addf %46, %53 : vector<1x1xf32>
    %c0_32 = arith.constant 0 : index
    %c0_33 = arith.constant 0 : index
    %55 = vector.load %arg11[%c0_32, %c0_33] : memref<1x1xf32, #tpu.memory_space<vmem>>, vector<1x1xf32>
    tpu.vector_store %arg11[%c0_32, %c0_33], %54 {strides = array<i32>} : memref<1x1xf32, #tpu.memory_space<vmem>>, vector<1x1xf32>,
    %56 = arith.extui %5 : i1 to i32
    %c0_i32_34 = arith.constant 0 : i32
    %57 = arith.cmpi ne, %56, %c0_i32_34 : i32
    scf.if %57 {
      %c0_35 = arith.constant 0 : index
      %c0_36 = arith.constant 0 : index
      %58 = vector.load %arg9[%c0_35, %c0_36] : memref<1x1xf32, #tpu.memory_space<vmem>>, vector<1x1xf32>
      %c0_37 = arith.constant 0 : index
      %c0_38 = arith.constant 0 : index
      %59 = vector.load %arg8[%c0_37, %c0_38] : memref<1x1xf32, #tpu.memory_space<vmem>>, vector<1x1xf32>
      %c0_39 = arith.constant 0 : index
      %c0_40 = arith.constant 0 : index
      %60 = vector.load %arg8[%c0_39, %c0_40] : memref<1x1xf32, #tpu.memory_space<vmem>>, vector<1x1xf32>
      %61 = arith.mulf %59, %60 : vector<1x1xf32>
      %cst_41 = arith.constant 2.03450527E-5 : f32
      %62 = vector.broadcast %cst_41 : f32 to vector<1x1xf32>
      %63 = arith.mulf %61, %62 : vector<1x1xf32>
      %64 = arith.subf %58, %63 : vector<1x1xf32>
      %cst_42 = arith.constant 2.03454656E-5 : f32
      %65 = vector.broadcast %cst_42 : f32 to vector<1x1xf32>
      %66 = arith.mulf %64, %65 : vector<1x1xf32>
      %c0_43 = arith.constant 0 : index
      %c0_44 = arith.constant 0 : index
      %67 = vector.load %arg11[%c0_43, %c0_44] : memref<1x1xf32, #tpu.memory_space<vmem>>, vector<1x1xf32>
      %c0_45 = arith.constant 0 : index
      %c0_46 = arith.constant 0 : index
      %68 = vector.load %arg10[%c0_45, %c0_46] : memref<1x1xf32, #tpu.memory_space<vmem>>, vector<1x1xf32>
      %c0_47 = arith.constant 0 : index
      %c0_48 = arith.constant 0 : index
      %69 = vector.load %arg10[%c0_47, %c0_48] : memref<1x1xf32, #tpu.memory_space<vmem>>, vector<1x1xf32>
      %70 = arith.mulf %68, %69 : vector<1x1xf32>
      %cst_49 = arith.constant 1.62760422E-4 : f32
      %71 = vector.broadcast %cst_49 : f32 to vector<1x1xf32>
      %72 = arith.mulf %70, %71 : vector<1x1xf32>
      %73 = arith.subf %67, %72 : vector<1x1xf32>
      %cst_50 = arith.constant 1.62786906E-4 : f32
      %74 = vector.broadcast %cst_50 : f32 to vector<1x1xf32>
      %75 = arith.mulf %73, %74 : vector<1x1xf32>
      %76 = math.sqrt %66 : vector<1x1xf32>
      %c0_51 = arith.constant 0 : index
      %c0_52 = arith.constant 0 : index
      %77 = vector.load %arg6[%c0_51, %c0_52] : memref<1x1xf32, #tpu.memory_space<vmem>>, vector<1x1xf32>
      tpu.vector_store %arg6[%c0_51, %c0_52], %76 {strides = array<i32>} : memref<1x1xf32, #tpu.memory_space<vmem>>, vector<1x1xf32>,
      %78 = math.sqrt %75 : vector<1x1xf32>
      %c0_53 = arith.constant 0 : index
      %c0_54 = arith.constant 0 : index
      %79 = vector.load %arg7[%c0_53, %c0_54] : memref<1x1xf32, #tpu.memory_space<vmem>>, vector<1x1xf32>
      tpu.vector_store %arg7[%c0_53, %c0_54], %78 {strides = array<i32>} : memref<1x1xf32, #tpu.memory_space<vmem>>, vector<1x1xf32>,
    } else {
    }
    return
  }
  func.func @transform_0(%arg0: i32, %arg1: i32) -> (i32, i32, i32) {
    %c0_i32 = arith.constant 0 : i32
    %c0_i32_0 = arith.constant 0 : i32
    return %arg0, %arg1, %c0_i32 : i32, i32, i32
  }
  func.func @transform_1(%arg0: i32, %arg1: i32) -> (i32, i32, i32, i32) {
    %c0_i32 = arith.constant 0 : i32
    %c0_i32_0 = arith.constant 0 : i32
    %c0_i32_1 = arith.constant 0 : i32
    return %arg0, %arg1, %c0_i32, %c0_i32_0 : i32, i32, i32, i32
  }
  func.func @transform_2(%arg0: i32, %arg1: i32) -> (i32, i32, i32) {
    %c0_i32 = arith.constant 0 : i32
    %c0_i32_0 = arith.constant 0 : i32
    return %arg0, %arg1, %c0_i32 : i32, i32, i32
  }
  func.func @transform_3(%arg0: i32, %arg1: i32) -> (i32, i32, i32, i32) {
    %c0_i32 = arith.constant 0 : i32
    %c0_i32_0 = arith.constant 0 : i32
    %c0_i32_1 = arith.constant 0 : i32
    return %arg0, %arg1, %c0_i32, %c0_i32_0 : i32, i32, i32, i32
  }
  func.func @transform_4(%arg0: i32, %arg1: i32) -> (i32, i32) {
    %c0_i32 = arith.constant 0 : i32
    %c0_i32_0 = arith.constant 0 : i32
    %c0_i32_1 = arith.constant 0 : i32
    return %c0_i32, %c0_i32_0 : i32, i32
  }
  func.func @transform_5(%arg0: i32, %arg1: i32) -> (i32, i32) {
    %c0_i32 = arith.constant 0 : i32
    %c0_i32_0 = arith.constant 0 : i32
    %c0_i32_1 = arith.constant 0 : i32
    return %c0_i32, %c0_i32_0 : i32, i32
  }
}

</mosaic_0001>

<llo_original>
// kernel: tpu_custom_call.1
$region0: #{tpu_custom_call.1}
  #allocation0 [shape = 'u32[]', space=smem, size = 0x4, offset = 0x4, fixed_abs, tag = 'smem constant byte address 0x4 - core index']
  #allocation1 [shape = 'u32[144,128]{1,0:T(1,128)}', space=vmem, size = 0x12000, scoped, tag = 'internal scratch']
  #allocation2 [shape = 'f32[1,1]{1,0:T(1,128)}', space=vmem, size = 0x200, scoped, tag = 'scratch operand']
  #allocation3 [shape = 'f32[1,1]{1,0:T(1,128)}', space=vmem, size = 0x200, scoped, tag = 'scratch operand']
  #allocation4 [shape = 'f32[1,1]{1,0:T(1,128)}', space=vmem, size = 0x200, scoped, tag = 'scratch operand']
  #allocation5 [shape = 'f32[1,1]{1,0:T(1,128)}', space=vmem, size = 0x200, scoped, tag = 'scratch operand']
  %s0 = inlined_call_operand.vmem [shape: f32[2,64,24], index: 0, kind: input, shape index: {}]
  %s1 = inlined_call_operand.vmem [shape: f32[2,64,16,24], index: 1, kind: input, shape index: {}]
  %s2 = inlined_call_operand.vmem [shape: f32[2,64,3], index: 2, kind: input, shape index: {}]
  %s3 = inlined_call_operand.vmem [shape: f32[2,64,16,3], index: 3, kind: input, shape index: {}]
  %s4 = inlined_call_operand.hbm [shape: f32[1,1], index: 4, kind: output, shape index: {0}]
  %s5 = inlined_call_operand.hbm [shape: f32[1,1], index: 5, kind: output, shape index: {1}]
  %6 = xla_tuple %s4, %s5
  %s7 = sld [smem:[#allocation0]]
  $region65: #{tpu_custom_call.1} parent=0
    _
  %s9 = ssub.s32 1, %s7
  %s10 = scalar_select 0, %s9, %s7
  $region1: #{tpu_custom_call.1} parent=0
    #allocation6 [shape = 'u8[512]{0}', space=vmem, size = 0x400, scoped, tag = 'output window, operand 0, single buffered']
    #allocation7 [shape = 's32[2]{0}', space=sflag, size = 0x8, scoped, tag = 'scoped memory for tpu_custom_call.1']
    #allocation8 [shape = 'u8[512]{0}', space=vmem, size = 0x400, scoped, tag = 'output window, operand 1, single buffered']
    #allocation9 [shape = 's32[1]{0}', space=sflag, size = 0x4, scoped, tag = 'scoped memory for tpu_custom_call.1']
    %11 = vsyncpa [#allocation7], 0
    %12 = vsyncpa [#allocation9], 0
    loop: start=0, step=1, limit=10
    $region2: #{tpu_custom_call.1} parent=1 // loop_pre_header
      _
    $region3: #{tpu_custom_call.1} parent=1 // loop_header
      %s14 = sphi 0, %s18
      %p15 = scmp.ge.s32.totalorder %s14, 10
      %s21 = sphi 0, %s33
      %s22 = sphi 0, %s29
      %s23 = sphi 0, %s21
      %s24 = sphi 0, %s22
      %s25 = sphi 0, %s23
      %s26 = sphi 0, %s24
      %s38 = sphi 0, %s40
      %s41 = sphi 0, %s38
      %s42 = sphi 0, %s41
      %s58 = sphi 0, %s42
      %s66 = sphi 0, %s68
      %s69 = sphi 0, %s66
      %s70 = sphi 0, %s69
      %s86 = sphi 0, %s70
      %s94 = sphi 0, %s96
      %s97 = sphi 0, %s94
      %s98 = sphi 0, %s97
      %s114 = sphi 0, %s98
      %s122 = sphi 0, %s124
      %s125 = sphi 0, %s122
      %s126 = sphi 0, %s125
      %s142 = sphi 0, %s126
      %s146 = sphi 0, %s146
      %s148 = sphi 0, %s146
      %s149 = sphi 0, %s148
      %s163 = sphi 0, %s149
      %s167 = sphi 0, %s167
      %s169 = sphi 0, %s167
      %s170 = sphi 0, %s169
      %s184 = sphi 0, %s170
    $region4: #{tpu_custom_call.1} parent=1 // loop_header_branch
      %17 = sbr.rel (%p15) target = $region8
    $region5: #{tpu_custom_call.1} parent=1 // loop_body
      %s19 = ssub.s32 %s14, 1
      %s20 = ssub.s32 %s14, 2
      %s27 = sadd.s32 1, %s22
      %p28 = scmp.ge.s32.totalorder %s27, 4
      %s29 = scalar_select %p28, 0, %s27
      %s30 = sadd.s32 1, %s21
      %s31 = scalar_select %p28, %s30, %s21
      %p32 = scmp.ge.s32.totalorder %s31, 2
      %s33 = scalar_select %p32, 0, %s31
      %s34 = ssub.s32 %s21, %s33
      %s35 = ssub.s32 %s22, %s29
      %s36 = sor.u32 %s34, %s35
      %p37 = scmp.eq.s32.totalorder %s36, 0
      %s39 = sadd.s32 %s38, 1
      %s40 = scalar_select %p37, %s38, %s39
      %p43 = pneg %p37
      %p44 = scmp.eq.s32.totalorder %s14, 7
      %p45 = por %p43, %p44
      %p46 = scmp.ne.s32.totalorder %s38, %s41
      %p47 = scmp.eq.s32.totalorder %s14, 0
      %p48 = por %p46, %p47
      %p49 = scmp.ne.s32.totalorder %s38, %s41
      %p50 = scmp.eq.s32.totalorder %s19, 7
      %p51 = por %p49, %p50
      %p52 = scmp.ne.s32.totalorder %s41, %s42
      %p53 = scmp.eq.s32.totalorder %s19, 0
      %p54 = por %p52, %p53
      %p55 = scmp.ne.s32.totalorder %s41, %s42
      %p56 = scmp.eq.s32.totalorder %s20, 7
      %p57 = por %p55, %p56
      %p59 = scmp.ne.s32.totalorder %s42, %s58
      %p60 = scmp.eq.s32.totalorder %s20, 0
      %p61 = por %p59, %p60
      %s62 = ssub.s32 %s21, %s33
      %s63 = ssub.s32 %s22, %s29
      %s64 = sor.u32 %s62, %s63
      %p65 = scmp.eq.s32.totalorder %s64, 0
      %s67 = sadd.s32 %s66, 1
      %s68 = scalar_select %p65, %s66, %s67
      %p71 = pneg %p65
      %p72 = scmp.eq.s32.totalorder %s14, 7
      %p73 = por %p71, %p72
      %p74 = scmp.ne.s32.totalorder %s66, %s69
      %p75 = scmp.eq.s32.totalorder %s14, 0
      %p76 = por %p74, %p75
      %p77 = scmp.ne.s32.totalorder %s66, %s69
      %p78 = scmp.eq.s32.totalorder %s19, 7
      %p79 = por %p77, %p78
      %p80 = scmp.ne.s32.totalorder %s69, %s70
      %p81 = scmp.eq.s32.totalorder %s19, 0
      %p82 = por %p80, %p81
      %p83 = scmp.ne.s32.totalorder %s69, %s70
      %p84 = scmp.eq.s32.totalorder %s20, 7
      %p85 = por %p83, %p84
      %p87 = scmp.ne.s32.totalorder %s70, %s86
      %p88 = scmp.eq.s32.totalorder %s20, 0
      %p89 = por %p87, %p88
      %s90 = ssub.s32 %s21, %s33
      %s91 = ssub.s32 %s22, %s29
      %s92 = sor.u32 %s90, %s91
      %p93 = scmp.eq.s32.totalorder %s92, 0
      %s95 = sadd.s32 %s94, 1
      %s96 = scalar_select %p93, %s94, %s95
      %p99 = pneg %p93
      %p100 = scmp.eq.s32.totalorder %s14, 7
      %p101 = por %p99, %p100
      %p102 = scmp.ne.s32.totalorder %s94, %s97
      %p103 = scmp.eq.s32.totalorder %s14, 0
      %p104 = por %p102, %p103
      %p105 = scmp.ne.s32.totalorder %s94, %s97
      %p106 = scmp.eq.s32.totalorder %s19, 7
      %p107 = por %p105, %p106
      %p108 = scmp.ne.s32.totalorder %s97, %s98
      %p109 = scmp.eq.s32.totalorder %s19, 0
      %p110 = por %p108, %p109
      %p111 = scmp.ne.s32.totalorder %s97, %s98
      %p112 = scmp.eq.s32.totalorder %s20, 7
      %p113 = por %p111, %p112
      %p115 = scmp.ne.s32.totalorder %s98, %s114
      %p116 = scmp.eq.s32.totalorder %s20, 0
      %p117 = por %p115, %p116
      %s118 = ssub.s32 %s21, %s33
      %s119 = ssub.s32 %s22, %s29
      %s120 = sor.u32 %s118, %s119
      %p121 = scmp.eq.s32.totalorder %s120, 0
      %s123 = sadd.s32 %s122, 1
      %s124 = scalar_select %p121, %s122, %s123
      %p127 = pneg %p121
      %p128 = scmp.eq.s32.totalorder %s14, 7
      %p129 = por %p127, %p128
      %p130 = scmp.ne.s32.totalorder %s122, %s125
      %p131 = scmp.eq.s32.totalorder %s14, 0
      %p132 = por %p130, %p131
      %p133 = scmp.ne.s32.totalorder %s122, %s125
      %p134 = scmp.eq.s32.totalorder %s19, 7
      %p135 = por %p133, %p134
      %p136 = scmp.ne.s32.totalorder %s125, %s126
      %p137 = scmp.eq.s32.totalorder %s19, 0
      %p138 = por %p136, %p137
      %p139 = scmp.ne.s32.totalorder %s125, %s126
      %p140 = scmp.eq.s32.totalorder %s20, 7
      %p141 = por %p139, %p140
      %p143 = scmp.ne.s32.totalorder %s126, %s142
      %p144 = scmp.eq.s32.totalorder %s20, 0
      %p145 = por %p143, %p144
      %s147 = sadd.s32 %s146, 1
      %p150 = scmp.eq.s32.totalorder %s14, 7
      %p151 = scmp.ne.s32.totalorder %s146, %s148
      %p152 = scmp.eq.s32.totalorder %s14, 0
      %p153 = por %p151, %p152
      %p154 = scmp.ne.s32.totalorder %s146, %s148
      %p155 = scmp.eq.s32.totalorder %s19, 7
      %p156 = por %p154, %p155
      %p157 = scmp.ne.s32.totalorder %s148, %s149
      %p158 = scmp.eq.s32.totalorder %s19, 0
      %p159 = por %p157, %p158
      %p160 = scmp.ne.s32.totalorder %s148, %s149
      %p161 = scmp.eq.s32.totalorder %s20, 7
      %p162 = por %p160, %p161
      %p164 = scmp.ne.s32.totalorder %s149, %s163
      %p165 = scmp.eq.s32.totalorder %s20, 0
      %p166 = por %p164, %p165
      %s168 = sadd.s32 %s167, 1
      %p171 = scmp.eq.s32.totalorder %s14, 7
      %p172 = scmp.ne.s32.totalorder %s167, %s169
      %p173 = scmp.eq.s32.totalorder %s14, 0
      %p174 = por %p172, %p173
      %p175 = scmp.ne.s32.totalorder %s167, %s169
      %p176 = scmp.eq.s32.totalorder %s19, 7
      %p177 = por %p175, %p176
      %p178 = scmp.ne.s32.totalorder %s169, %s170
      %p179 = scmp.eq.s32.totalorder %s19, 0
      %p180 = por %p178, %p179
      %p181 = scmp.ne.s32.totalorder %s169, %s170
      %p182 = scmp.eq.s32.totalorder %s20, 7
      %p183 = por %p181, %p182
      %p185 = scmp.ne.s32.totalorder %s170, %s184
      %p186 = scmp.eq.s32.totalorder %s20, 0
      %p187 = por %p185, %p186
      %p188 = scmp.le.s32.totalorder 1, %s14
      %p189 = scmp.lt.s32.totalorder %s14, 9
      %p190 = pnand %p188, %p189
      %p191 = pneg %p190
      // Predicated region
      $region9: #{tpu_custom_call.1} parent=5 // pred_check
        _
      $region10: #{tpu_custom_call.1} parent=5 // pred_check_branch
        %193 = sbr.rel (%p190) target = $region12
      $region11: #{tpu_custom_call.1} parent=5 // pred_region
        %s194 = ssub.s32 %s14, 1
      $region12: #{tpu_custom_call.1} parent=5 // pred_fallthru
        _
      %p195 = scmp.lt.s32.totalorder %s14, 8
      // Predicated region
      $region13: #{tpu_custom_call.1} parent=5 // pred_check
        %p196 = pneg %p195
      $region14: #{tpu_custom_call.1} parent=5 // pred_check_branch
        %198 = sbr.rel (%p196) target = $region16
      $region15: #{tpu_custom_call.1} parent=5 // pred_region
        // Predicated region
        $region17: #{tpu_custom_call.1} parent=15 // pred_check
          %p199 = pneg %p48
        $region18: #{tpu_custom_call.1} parent=15 // pred_check_branch
          %201 = sbr.rel (%p199) target = $region20
        $region19: #{tpu_custom_call.1} parent=15 // pred_region
          %s202 = smul.u32 2, %s22
          %p203 = scmp.lt.s32.totalorder %s21, 1
          %s204 = scalar_select %p203, %s21, 1
          %p205 = scmp.lt.s32.totalorder %s202, 7
          %s206 = scalar_select %p205, %s202, 7
          %s207 = smul.addr %s204, 8
          %s208 = sadd.s32 %s206, %s207
          %s209 = smul.addr %s208, 8
          %s210 = scalar_lea.vmem %s0, %s209
          %s211 = smul.u32 2, %s22
        $region20: #{tpu_custom_call.1} parent=15 // pred_fallthru
          _
        // Predicated region
        $region21: #{tpu_custom_call.1} parent=15 // pred_check
          %p212 = pneg %p76
        $region22: #{tpu_custom_call.1} parent=15 // pred_check_branch
          %214 = sbr.rel (%p212) target = $region24
        $region23: #{tpu_custom_call.1} parent=15 // pred_region
          %s215 = smul.u32 16, %s22
          %p216 = scmp.lt.s32.totalorder %s21, 1
          %s217 = scalar_select %p216, %s21, 1
          %p218 = scmp.lt.s32.totalorder %s215, 63
          %s219 = scalar_select %p218, %s215, 63
          %s220 = smul.addr %s219, 2
          %s221 = smul.addr %s217, 128
          %s222 = sadd.s32 %s220, %s221
          %s223 = smul.addr %s222, 8
          %s224 = scalar_lea.vmem %s1, %s223
          %s225 = smul.u32 16, %s22
        $region24: #{tpu_custom_call.1} parent=15 // pred_fallthru
          _
        // Predicated region
        $region25: #{tpu_custom_call.1} parent=15 // pred_check
          %p226 = pneg %p104
        $region26: #{tpu_custom_call.1} parent=15 // pred_check_branch
          %228 = sbr.rel (%p226) target = $region28
        $region27: #{tpu_custom_call.1} parent=15 // pred_region
          %s229 = smul.u32 2, %s22
          %p230 = scmp.lt.s32.totalorder %s21, 1
          %s231 = scalar_select %p230, %s21, 1
          %p232 = scmp.lt.s32.totalorder %s229, 7
          %s233 = scalar_select %p232, %s229, 7
          %s234 = smul.addr %s231, 8
          %s235 = sadd.s32 %s233, %s234
          %s236 = smul.addr %s235, 8
          %s237 = scalar_lea.vmem %s2, %s236
          %s238 = smul.u32 2, %s22
        $region28: #{tpu_custom_call.1} parent=15 // pred_fallthru
          _
        // Predicated region
        $region29: #{tpu_custom_call.1} parent=15 // pred_check
          %p239 = pneg %p132
        $region30: #{tpu_custom_call.1} parent=15 // pred_check_branch
          %241 = sbr.rel (%p239) target = $region32
        $region31: #{tpu_custom_call.1} parent=15 // pred_region
          %s242 = smul.u32 16, %s22
          %p243 = scmp.lt.s32.totalorder %s21, 1
          %s244 = scalar_select %p243, %s21, 1
          %p245 = scmp.lt.s32.totalorder %s242, 63
          %s246 = scalar_select %p245, %s242, 63
          %s247 = smul.addr %s246, 2
          %s248 = smul.addr %s244, 128
          %s249 = sadd.s32 %s247, %s248
          %s250 = smul.addr %s249, 8
          %s251 = scalar_lea.vmem %s3, %s250
          %s252 = smul.u32 16, %s22
        $region32: #{tpu_custom_call.1} parent=15 // pred_fallthru
          _
      $region16: #{tpu_custom_call.1} parent=5 // pred_fallthru
        _
      %p253 = scmp.le.s32.totalorder 1, %s14
      %p254 = scmp.lt.s32.totalorder %s14, 9
      %p255 = pnand %p253, %p254
      %p256 = pneg %p255
      // Predicated region
      $region33: #{tpu_custom_call.1} parent=5 // pred_check
        _
      $region34: #{tpu_custom_call.1} parent=5 // pred_check_branch
        %258 = sbr.rel (%p255) target = $region36
      $region35: #{tpu_custom_call.1} parent=5 // pred_region
        %s259 = ssub.s32 %s14, 1
        %s260 = smul.u32 2, %s24
        %p261 = scmp.lt.s32.totalorder %s23, 1
        %s262 = scalar_select %p261, %s23, 1
        %p263 = scmp.lt.s32.totalorder %s260, 7
        %s264 = scalar_select %p263, %s260, 7
        %s265 = smul.addr %s262, 8
        %s266 = sadd.s32 %s264, %s265
        %s267 = smul.addr %s266, 8
        %s268 = scalar_lea.vmem %s0, %s267
        %p269 = pneg %p54
        %p270 = pneg %p51
        %s271 = smul.u32 16, %s24
        %p272 = scmp.lt.s32.totalorder %s23, 1
        %s273 = scalar_select %p272, %s23, 1
        %p274 = scmp.lt.s32.totalorder %s271, 63
        %s275 = scalar_select %p274, %s271, 63
        %s276 = smul.addr %s275, 2
        %s277 = smul.addr %s273, 128
        %s278 = sadd.s32 %s276, %s277
        %s279 = smul.addr %s278, 8
        %s280 = scalar_lea.vmem %s1, %s279
        %p281 = pneg %p82
        %p282 = pneg %p79
        %s283 = smul.u32 2, %s24
        %p284 = scmp.lt.s32.totalorder %s23, 1
        %s285 = scalar_select %p284, %s23, 1
        %p286 = scmp.lt.s32.totalorder %s283, 7
        %s287 = scalar_select %p286, %s283, 7
        %s288 = smul.addr %s285, 8
        %s289 = sadd.s32 %s287, %s288
        %s290 = smul.addr %s289, 8
        %s291 = scalar_lea.vmem %s2, %s290
        %p292 = pneg %p110
        %p293 = pneg %p107
        %s294 = smul.u32 16, %s24
        %p295 = scmp.lt.s32.totalorder %s23, 1
        %s296 = scalar_select %p295, %s23, 1
        %p297 = scmp.lt.s32.totalorder %s294, 63
        %s298 = scalar_select %p297, %s294, 63
        %s299 = smul.addr %s298, 2
        %s300 = smul.addr %s296, 128
        %s301 = sadd.s32 %s299, %s300
        %s302 = smul.addr %s301, 8
        %s303 = scalar_lea.vmem %s3, %s302
        %p304 = pneg %p138
        %p305 = pneg %p135
        %p306 = pneg %p159
        %p307 = pneg %p156
        %p308 = pneg %p180
        %p309 = pneg %p177
        %s310 = smul.u32 2, %s24
        %p311 = scmp.lt.s32.totalorder %s23, 1
        %s312 = scalar_select %p311, %s23, 1
        %p313 = scmp.lt.s32.totalorder %s310, 7
        %s314 = scalar_select %p313, %s310, 7
        %s315 = smul.addr %s312, 8
        %s316 = sadd.s32 %s314, %s315
        %s317 = smul.addr %s316, 8
        %s318 = scalar_lea.vmem %s0, %s317
        %s319 = smul.u32 2, %s24
        %s320 = smul.u32 16, %s24
        %p321 = scmp.lt.s32.totalorder %s23, 1
        %s322 = scalar_select %p321, %s23, 1
        %p323 = scmp.lt.s32.totalorder %s320, 63
        %s324 = scalar_select %p323, %s320, 63
        %s325 = smul.addr %s324, 2
        %s326 = smul.addr %s322, 128
        %s327 = sadd.s32 %s325, %s326
        %s328 = smul.addr %s327, 8
        %s329 = scalar_lea.vmem %s1, %s328
        %s330 = smul.u32 16, %s24
        %s331 = smul.u32 2, %s24
        %p332 = scmp.lt.s32.totalorder %s23, 1
        %s333 = scalar_select %p332, %s23, 1
        %p334 = scmp.lt.s32.totalorder %s331, 7
        %s335 = scalar_select %p334, %s331, 7
        %s336 = smul.addr %s333, 8
        %s337 = sadd.s32 %s335, %s336
        %s338 = smul.addr %s337, 8
        %s339 = scalar_lea.vmem %s2, %s338
        %s340 = smul.u32 2, %s24
        %s341 = smul.u32 16, %s24
        %p342 = scmp.lt.s32.totalorder %s23, 1
        %s343 = scalar_select %p342, %s23, 1
        %p344 = scmp.lt.s32.totalorder %s341, 63
        %s345 = scalar_select %p344, %s341, 63
        %s346 = smul.addr %s345, 2
        %s347 = smul.addr %s343, 128
        %s348 = sadd.s32 %s346, %s347
        %s349 = smul.addr %s348, 8
        %s350 = scalar_lea.vmem %s3, %s349
        %s351 = smul.u32 16, %s24
        %p352 = scmp.eq.s32.totalorder %s23, 0
        %p353 = scmp.eq.s32.totalorder %s24, 0
        %p354 = pnand %p352, %p353
        %p355 = pneg %p354
        %p356 = scmp.eq.s32.totalorder %s23, 1
        %p357 = scmp.eq.s32.totalorder %s24, 3
        %p358 = pnand %p356, %p357
        %p359 = pneg %p358
        // Predicated region
        $region37: #{tpu_custom_call.1} parent=35 // pred_check
          _
        $region38: #{tpu_custom_call.1} parent=35 // pred_check_branch
          %361 = sbr.rel (%p354) target = $region40
        $region39: #{tpu_custom_call.1} parent=35 // pred_region
          %vm362 = vcmask 0
          %363 = vst.msk [vmem:[#allocation2] sm:$0x1] %vm362, 0.0
          %364 = vst.msk [vmem:[#allocation3] sm:$0x1] %vm362, 0.0
          %365 = vst.msk [vmem:[#allocation4] sm:$0x1] %vm362, 0.0
          %366 = vst.msk [vmem:[#allocation5] sm:$0x1] %vm362, 0.0
        $region40: #{tpu_custom_call.1} parent=35 // pred_fallthru
          _
        %v367 = vld [vmem:[%s329] sm:$0xff]
        %v368 = vld [vmem:[%s329 + $0x8] sm:$0xff]
        %v369 = vld [vmem:[%s329 + $0x10] sm:$0xff]
        %v370 = vld [vmem:[%s329 + $0x18] sm:$0xff]
        %v371 = vld [vmem:[%s329 + $0x20] sm:$0xff]
        %v372 = vld [vmem:[%s329 + $0x28] sm:$0xff]
        %v373 = vld [vmem:[%s329 + $0x30] sm:$0xff]
        %v374 = vld [vmem:[%s329 + $0x38] sm:$0xff]
        %v375 = vld [vmem:[%s329 + $0x40] sm:$0xff]
        %v376 = vld [vmem:[%s329 + $0x48] sm:$0xff]
        %v377 = vld [vmem:[%s329 + $0x50] sm:$0xff]
        %v378 = vld [vmem:[%s329 + $0x58] sm:$0xff]
        %v379 = vld [vmem:[%s329 + $0x60] sm:$0xff]
        %v380 = vld [vmem:[%s329 + $0x68] sm:$0xff]
        %v381 = vld [vmem:[%s329 + $0x70] sm:$0xff]
        %v382 = vld [vmem:[%s329 + $0x78] sm:$0xff]
        %v383 = vld [vmem:[%s329 + $0x80] sm:$0xff]
        %v384 = vld [vmem:[%s329 + $0x88] sm:$0xff]
        %v385 = vld [vmem:[%s329 + $0x90] sm:$0xff]
        %v386 = vld [vmem:[%s329 + $0x98] sm:$0xff]
        %v387 = vld [vmem:[%s329 + $0xa0] sm:$0xff]
        %v388 = vld [vmem:[%s329 + $0xa8] sm:$0xff]
        %v389 = vld [vmem:[%s329 + $0xb0] sm:$0xff]
        %v390 = vld [vmem:[%s329 + $0xb8] sm:$0xff]
        %v391 = vld [vmem:[%s329 + $0xc0] sm:$0xff]
        %v392 = vld [vmem:[%s329 + $0xc8] sm:$0xff]
        %v393 = vld [vmem:[%s329 + $0xd0] sm:$0xff]
        %v394 = vld [vmem:[%s329 + $0xd8] sm:$0xff]
        %v395 = vld [vmem:[%s329 + $0xe0] sm:$0xff]
        %v396 = vld [vmem:[%s329 + $0xe8] sm:$0xff]
        %v397 = vld [vmem:[%s329 + $0xf0] sm:$0xff]
        %v398 = vld [vmem:[%s329 + $0xf8] sm:$0xff]
        %v399 = vld [vmem:[%s318] sm:$0xff]
        %v400 = vld [vmem:[%s318 + $0x8] sm:$0xff]
        %v403 = vcombine.high %v399, %v399
        %v405 = vunpack.c.l.s4 1966171168
        %v406 = vunpack.c.0.s8 %v405
        %v407 = vlaneseq
        %v408 = vshrl.u32 %v407, 7
        %v409 = vsub.s32 %v406, %v408
        %v410 = vrot.slane %v399, %v409
        %v412 = vunpack.c.l.s4 1966171168
        %v413 = vunpack.c.0.s8 %v412
        %v414 = vlaneseq
        %v415 = vshrl.u32 %v414, 7
        %v416 = vsub.s32 %v413, %v415
        %v417 = vrot.slane %v403, %v416
        %v418 = vcombine.high %v410, %v410
        %v419 = vcombine.high %v417, %v417
        %v421 = vunpack.c.l.s4 1966171168
        %v422 = vunpack.c.0.s8 %v421
        %v423 = vlaneseq
        %v424 = vshrl.u32 %v423, 7
        %v425 = vsub.s32 %v422, %v424
        %v426 = vrot.slane %v410, %v425
        %v428 = vunpack.c.l.s4 1966171168
        %v429 = vunpack.c.0.s8 %v428
        %v430 = vlaneseq
        %v431 = vshrl.u32 %v430, 7
        %v432 = vsub.s32 %v429, %v431
        %v433 = vrot.slane %v417, %v432
        %v435 = vunpack.c.l.s4 1966171168
        %v436 = vunpack.c.0.s8 %v435
        %v437 = vlaneseq
        %v438 = vshrl.u32 %v437, 7
        %v439 = vsub.s32 %v436, %v438
        %v440 = vrot.slane %v418, %v439
        %v442 = vunpack.c.l.s4 1966171168
        %v443 = vunpack.c.0.s8 %v442
        %v444 = vlaneseq
        %v445 = vshrl.u32 %v444, 7
        %v446 = vsub.s32 %v443, %v445
        %v447 = vrot.slane %v419, %v446
        %v448 = vcombine.high %v426, %v426
        %v449 = vcombine.high %v433, %v433
        %v450 = vcombine.high %v440, %v440
        %v451 = vcombine.high %v447, %v447
        %v452 = vcombine.high %v400, %v400
        %v454 = vunpack.c.l.s4 1966171168
        %v455 = vunpack.c.0.s8 %v454
        %v456 = vlaneseq
        %v457 = vshrl.u32 %v456, 7
        %v458 = vsub.s32 %v455, %v457
        %v459 = vrot.slane %v400, %v458
        %v461 = vunpack.c.l.s4 1966171168
        %v462 = vunpack.c.0.s8 %v461
        %v463 = vlaneseq
        %v464 = vshrl.u32 %v463, 7
        %v465 = vsub.s32 %v462, %v464
        %v466 = vrot.slane %v452, %v465
        %v467 = vcombine.high %v459, %v459
        %v468 = vcombine.high %v466, %v466
        %v470 = vunpack.c.l.s4 1966171168
        %v471 = vunpack.c.0.s8 %v470
        %v472 = vlaneseq
        %v473 = vshrl.u32 %v472, 7
        %v474 = vsub.s32 %v471, %v473
        %v475 = vrot.slane %v459, %v474
        %v477 = vunpack.c.l.s4 1966171168
        %v478 = vunpack.c.0.s8 %v477
        %v479 = vlaneseq
        %v480 = vshrl.u32 %v479, 7
        %v481 = vsub.s32 %v478, %v480
        %v482 = vrot.slane %v466, %v481
        %v484 = vunpack.c.l.s4 1966171168
        %v485 = vunpack.c.0.s8 %v484
        %v486 = vlaneseq
        %v487 = vshrl.u32 %v486, 7
        %v488 = vsub.s32 %v485, %v487
        %v489 = vrot.slane %v467, %v488
        %v491 = vunpack.c.l.s4 1966171168
        %v492 = vunpack.c.0.s8 %v491
        %v493 = vlaneseq
        %v494 = vshrl.u32 %v493, 7
        %v495 = vsub.s32 %v492, %v494
        %v496 = vrot.slane %v468, %v495
        %v497 = vcombine.high %v475, %v475
        %v498 = vcombine.high %v482, %v482
        %v499 = vcombine.high %v489, %v489
        %v500 = vcombine.high %v496, %v496
        %v501 = vlaneseq
        %v502 = vshrl.u32 %v501, 7
        %v503 = vsub.s32 0, %v502
        %v504 = vrot.slane %v426, %v503
        %v505 = vlaneseq
        %v506 = vshrl.u32 %v505, 7
        %v507 = vsub.s32 0, %v506
        %v508 = vrot.slane %v440, %v507
        %v509 = vlaneseq
        %v510 = vshrl.u32 %v509, 7
        %v511 = vsub.s32 0, %v510
        %v512 = vrot.slane %v448, %v511
        %v513 = vlaneseq
        %v514 = vshrl.u32 %v513, 7
        %v515 = vsub.s32 0, %v514
        %v516 = vrot.slane %v450, %v515
        %v517 = vlaneseq
        %v518 = vshrl.u32 %v517, 7
        %v519 = vsub.s32 0, %v518
        %v520 = vrot.slane %v433, %v519
        %v521 = vlaneseq
        %v522 = vshrl.u32 %v521, 7
        %v523 = vsub.s32 0, %v522
        %v524 = vrot.slane %v447, %v523
        %v525 = vlaneseq
        %v526 = vshrl.u32 %v525, 7
        %v527 = vsub.s32 0, %v526
        %v528 = vrot.slane %v449, %v527
        %v529 = vlaneseq
        %v530 = vshrl.u32 %v529, 7
        %v531 = vsub.s32 0, %v530
        %v532 = vrot.slane %v451, %v531
        %v533 = vlaneseq
        %v534 = vshrl.u32 %v533, 7
        %v535 = vsub.s32 0, %v534
        %v536 = vrot.slane %v475, %v535
        %v537 = vlaneseq
        %v538 = vshrl.u32 %v537, 7
        %v539 = vsub.s32 0, %v538
        %v540 = vrot.slane %v489, %v539
        %v541 = vlaneseq
        %v542 = vshrl.u32 %v541, 7
        %v543 = vsub.s32 0, %v542
        %v544 = vrot.slane %v497, %v543
        %v545 = vlaneseq
        %v546 = vshrl.u32 %v545, 7
        %v547 = vsub.s32 0, %v546
        %v548 = vrot.slane %v499, %v547
        %v549 = vlaneseq
        %v550 = vshrl.u32 %v549, 7
        %v551 = vsub.s32 0, %v550
        %v552 = vrot.slane %v482, %v551
        %v553 = vlaneseq
        %v554 = vshrl.u32 %v553, 7
        %v555 = vsub.s32 0, %v554
        %v556 = vrot.slane %v496, %v555
        %v557 = vlaneseq
        %v558 = vshrl.u32 %v557, 7
        %v559 = vsub.s32 0, %v558
        %v560 = vrot.slane %v498, %v559
        %v561 = vlaneseq
        %v562 = vshrl.u32 %v561, 7
        %v563 = vsub.s32 0, %v562
        %v564 = vrot.slane %v500, %v563
        %v581 = vsub.f32 %v367, %v504
        %v582 = vsub.f32 %v368, %v504
        %v583 = vsub.f32 %v369, %v508
        %v584 = vsub.f32 %v370, %v508
        %v585 = vsub.f32 %v371, %v512
        %v586 = vsub.f32 %v372, %v512
        %v587 = vsub.f32 %v373, %v516
        %v588 = vsub.f32 %v374, %v516
        %v589 = vsub.f32 %v375, %v520
        %v590 = vsub.f32 %v376, %v520
        %v591 = vsub.f32 %v377, %v524
        %v592 = vsub.f32 %v378, %v524
        %v593 = vsub.f32 %v379, %v528
        %v594 = vsub.f32 %v380, %v528
        %v595 = vsub.f32 %v381, %v532
        %v596 = vsub.f32 %v382, %v532
        %v597 = vsub.f32 %v383, %v536
        %v598 = vsub.f32 %v384, %v536
        %v599 = vsub.f32 %v385, %v540
        %v600 = vsub.f32 %v386, %v540
        %v601 = vsub.f32 %v387, %v544
        %v602 = vsub.f32 %v388, %v544
        %v603 = vsub.f32 %v389, %v548
        %v604 = vsub.f32 %v390, %v548
        %v605 = vsub.f32 %v391, %v552
        %v606 = vsub.f32 %v392, %v552
        %v607 = vsub.f32 %v393, %v556
        %v608 = vsub.f32 %v394, %v556
        %v609 = vsub.f32 %v395, %v560
        %v610 = vsub.f32 %v396, %v560
        %v611 = vsub.f32 %v397, %v564
        %v612 = vsub.f32 %v398, %v564
        %v613 = vld [vmem:[%s350] sm:$0xff]
        %v614 = vld [vmem:[%s350 + $0x8] sm:$0xff]
        %v615 = vld [vmem:[%s350 + $0x10] sm:$0xff]
        %v616 = vld [vmem:[%s350 + $0x18] sm:$0xff]
        %v617 = vld [vmem:[%s350 + $0x20] sm:$0xff]
        %v618 = vld [vmem:[%s350 + $0x28] sm:$0xff]
        %v619 = vld [vmem:[%s350 + $0x30] sm:$0xff]
        %v620 = vld [vmem:[%s350 + $0x38] sm:$0xff]
        %v621 = vld [vmem:[%s350 + $0x40] sm:$0xff]
        %v622 = vld [vmem:[%s350 + $0x48] sm:$0xff]
        %v623 = vld [vmem:[%s350 + $0x50] sm:$0xff]
        %v624 = vld [vmem:[%s350 + $0x58] sm:$0xff]
        %v625 = vld [vmem:[%s350 + $0x60] sm:$0xff]
        %v626 = vld [vmem:[%s350 + $0x68] sm:$0xff]
        %v627 = vld [vmem:[%s350 + $0x70] sm:$0xff]
        %v628 = vld [vmem:[%s350 + $0x78] sm:$0xff]
        %v629 = vld [vmem:[%s350 + $0x80] sm:$0xff]
        %v630 = vld [vmem:[%s350 + $0x88] sm:$0xff]
        %v631 = vld [vmem:[%s350 + $0x90] sm:$0xff]
        %v632 = vld [vmem:[%s350 + $0x98] sm:$0xff]
        %v633 = vld [vmem:[%s350 + $0xa0] sm:$0xff]
        %v634 = vld [vmem:[%s350 + $0xa8] sm:$0xff]
        %v635 = vld [vmem:[%s350 + $0xb0] sm:$0xff]
        %v636 = vld [vmem:[%s350 + $0xb8] sm:$0xff]
        %v637 = vld [vmem:[%s350 + $0xc0] sm:$0xff]
        %v638 = vld [vmem:[%s350 + $0xc8] sm:$0xff]
        %v639 = vld [vmem:[%s350 + $0xd0] sm:$0xff]
        %v640 = vld [vmem:[%s350 + $0xd8] sm:$0xff]
        %v641 = vld [vmem:[%s350 + $0xe0] sm:$0xff]
        %v642 = vld [vmem:[%s350 + $0xe8] sm:$0xff]
        %v643 = vld [vmem:[%s350 + $0xf0] sm:$0xff]
        %v644 = vld [vmem:[%s350 + $0xf8] sm:$0xff]
        %v645 = vld [vmem:[%s339] sm:$0xff]
        %v646 = vld [vmem:[%s339 + $0x8] sm:$0xff]
        %v649 = vcombine.high %v645, %v645
        %v651 = vunpack.c.l.s4 1966171168
        %v652 = vunpack.c.0.s8 %v651
        %v653 = vlaneseq
        %v654 = vshrl.u32 %v653, 7
        %v655 = vsub.s32 %v652, %v654
        %v656 = vrot.slane %v645, %v655
        %v658 = vunpack.c.l.s4 1966171168
        %v659 = vunpack.c.0.s8 %v658
        %v660 = vlaneseq
        %v661 = vshrl.u32 %v660, 7
        %v662 = vsub.s32 %v659, %v661
        %v663 = vrot.slane %v649, %v662
        %v664 = vcombine.high %v656, %v656
        %v665 = vcombine.high %v663, %v663
        %v667 = vunpack.c.l.s4 1966171168
        %v668 = vunpack.c.0.s8 %v667
        %v669 = vlaneseq
        %v670 = vshrl.u32 %v669, 7
        %v671 = vsub.s32 %v668, %v670
        %v672 = vrot.slane %v656, %v671
        %v674 = vunpack.c.l.s4 1966171168
        %v675 = vunpack.c.0.s8 %v674
        %v676 = vlaneseq
        %v677 = vshrl.u32 %v676, 7
        %v678 = vsub.s32 %v675, %v677
        %v679 = vrot.slane %v663, %v678
        %v681 = vunpack.c.l.s4 1966171168
        %v682 = vunpack.c.0.s8 %v681
        %v683 = vlaneseq
        %v684 = vshrl.u32 %v683, 7
        %v685 = vsub.s32 %v682, %v684
        %v686 = vrot.slane %v664, %v685
        %v688 = vunpack.c.l.s4 1966171168
        %v689 = vunpack.c.0.s8 %v688
        %v690 = vlaneseq
        %v691 = vshrl.u32 %v690, 7
        %v692 = vsub.s32 %v689, %v691
        %v693 = vrot.slane %v665, %v692
        %v694 = vcombine.high %v672, %v672
        %v695 = vcombine.high %v679, %v679
        %v696 = vcombine.high %v686, %v686
        %v697 = vcombine.high %v693, %v693
        %v698 = vcombine.high %v646, %v646
        %v700 = vunpack.c.l.s4 1966171168
        %v701 = vunpack.c.0.s8 %v700
        %v702 = vlaneseq
        %v703 = vshrl.u32 %v702, 7
        %v704 = vsub.s32 %v701, %v703
        %v705 = vrot.slane %v646, %v704
        %v707 = vunpack.c.l.s4 1966171168
        %v708 = vunpack.c.0.s8 %v707
        %v709 = vlaneseq
        %v710 = vshrl.u32 %v709, 7
        %v711 = vsub.s32 %v708, %v710
        %v712 = vrot.slane %v698, %v711
        %v713 = vcombine.high %v705, %v705
        %v714 = vcombine.high %v712, %v712
        %v716 = vunpack.c.l.s4 1966171168
        %v717 = vunpack.c.0.s8 %v716
        %v718 = vlaneseq
        %v719 = vshrl.u32 %v718, 7
        %v720 = vsub.s32 %v717, %v719
        %v721 = vrot.slane %v705, %v720
        %v723 = vunpack.c.l.s4 1966171168
        %v724 = vunpack.c.0.s8 %v723
        %v725 = vlaneseq
        %v726 = vshrl.u32 %v725, 7
        %v727 = vsub.s32 %v724, %v726
        %v728 = vrot.slane %v712, %v727
        %v730 = vunpack.c.l.s4 1966171168
        %v731 = vunpack.c.0.s8 %v730
        %v732 = vlaneseq
        %v733 = vshrl.u32 %v732, 7
        %v734 = vsub.s32 %v731, %v733
        %v735 = vrot.slane %v713, %v734
        %v737 = vunpack.c.l.s4 1966171168
        %v738 = vunpack.c.0.s8 %v737
        %v739 = vlaneseq
        %v740 = vshrl.u32 %v739, 7
        %v741 = vsub.s32 %v738, %v740
        %v742 = vrot.slane %v714, %v741
        %v743 = vcombine.high %v721, %v721
        %v744 = vcombine.high %v728, %v728
        %v745 = vcombine.high %v735, %v735
        %v746 = vcombine.high %v742, %v742
        %v747 = vlaneseq
        %v748 = vshrl.u32 %v747, 7
        %v749 = vsub.s32 0, %v748
        %v750 = vrot.slane %v672, %v749
        %v751 = vlaneseq
        %v752 = vshrl.u32 %v751, 7
        %v753 = vsub.s32 0, %v752
        %v754 = vrot.slane %v686, %v753
        %v755 = vlaneseq
        %v756 = vshrl.u32 %v755, 7
        %v757 = vsub.s32 0, %v756
        %v758 = vrot.slane %v694, %v757
        %v759 = vlaneseq
        %v760 = vshrl.u32 %v759, 7
        %v761 = vsub.s32 0, %v760
        %v762 = vrot.slane %v696, %v761
        %v763 = vlaneseq
        %v764 = vshrl.u32 %v763, 7
        %v765 = vsub.s32 0, %v764
        %v766 = vrot.slane %v679, %v765
        %v767 = vlaneseq
        %v768 = vshrl.u32 %v767, 7
        %v769 = vsub.s32 0, %v768
        %v770 = vrot.slane %v693, %v769
        %v771 = vlaneseq
        %v772 = vshrl.u32 %v771, 7
        %v773 = vsub.s32 0, %v772
        %v774 = vrot.slane %v695, %v773
        %v775 = vlaneseq
        %v776 = vshrl.u32 %v775, 7
        %v777 = vsub.s32 0, %v776
        %v778 = vrot.slane %v697, %v777
        %v779 = vlaneseq
        %v780 = vshrl.u32 %v779, 7
        %v781 = vsub.s32 0, %v780
        %v782 = vrot.slane %v721, %v781
        %v783 = vlaneseq
        %v784 = vshrl.u32 %v783, 7
        %v785 = vsub.s32 0, %v784
        %v786 = vrot.slane %v735, %v785
        %v787 = vlaneseq
        %v788 = vshrl.u32 %v787, 7
        %v789 = vsub.s32 0, %v788
        %v790 = vrot.slane %v743, %v789
        %v791 = vlaneseq
        %v792 = vshrl.u32 %v791, 7
        %v793 = vsub.s32 0, %v792
        %v794 = vrot.slane %v745, %v793
        %v795 = vlaneseq
        %v796 = vshrl.u32 %v795, 7
        %v797 = vsub.s32 0, %v796
        %v798 = vrot.slane %v728, %v797
        %v799 = vlaneseq
        %v800 = vshrl.u32 %v799, 7
        %v801 = vsub.s32 0, %v800
        %v802 = vrot.slane %v742, %v801
        %v803 = vlaneseq
        %v804 = vshrl.u32 %v803, 7
        %v805 = vsub.s32 0, %v804
        %v806 = vrot.slane %v744, %v805
        %v807 = vlaneseq
        %v808 = vshrl.u32 %v807, 7
        %v809 = vsub.s32 0, %v808
        %v810 = vrot.slane %v746, %v809
        %v827 = vsub.f32 %v613, %v750
        %v828 = vsub.f32 %v614, %v750
        %v829 = vsub.f32 %v615, %v754
        %v830 = vsub.f32 %v616, %v754
        %v831 = vsub.f32 %v617, %v758
        %v832 = vsub.f32 %v618, %v758
        %v833 = vsub.f32 %v619, %v762
        %v834 = vsub.f32 %v620, %v762
        %v835 = vsub.f32 %v621, %v766
        %v836 = vsub.f32 %v622, %v766
        %v837 = vsub.f32 %v623, %v770
        %v838 = vsub.f32 %v624, %v770
        %v839 = vsub.f32 %v625, %v774
        %v840 = vsub.f32 %v626, %v774
        %v841 = vsub.f32 %v627, %v778
        %v842 = vsub.f32 %v628, %v778
        %v843 = vsub.f32 %v629, %v782
        %v844 = vsub.f32 %v630, %v782
        %v845 = vsub.f32 %v631, %v786
        %v846 = vsub.f32 %v632, %v786
        %v847 = vsub.f32 %v633, %v790
        %v848 = vsub.f32 %v634, %v790
        %v849 = vsub.f32 %v635, %v794
        %v850 = vsub.f32 %v636, %v794
        %v851 = vsub.f32 %v637, %v798
        %v852 = vsub.f32 %v638, %v798
        %v853 = vsub.f32 %v639, %v802
        %v854 = vsub.f32 %v640, %v802
        %v855 = vsub.f32 %v641, %v806
        %v856 = vsub.f32 %v642, %v806
        %v857 = vsub.f32 %v643, %v810
        %v858 = vsub.f32 %v644, %v810
        %v859 = vld [vmem:[#allocation2] sm:$0x1]
        %vm860 = vcmask 195584
        %v861 = vsel %vm860, %v581, 0.0
        %v862 = vsel %vm860, %v582, 0.0
        %v863 = vadd.f32 %v861, %v862
        %v864 = vsel %vm860, %v583, 0.0
        %v865 = vadd.f32 %v863, %v864
        %v866 = vsel %vm860, %v584, 0.0
        %v867 = vadd.f32 %v865, %v866
        %v868 = vsel %vm860, %v585, 0.0
        %v869 = vadd.f32 %v867, %v868
        %v870 = vsel %vm860, %v586, 0.0
        %v871 = vadd.f32 %v869, %v870
        %v872 = vsel %vm860, %v587, 0.0
        %v873 = vadd.f32 %v871, %v872
        %v874 = vsel %vm860, %v588, 0.0
        %v875 = vadd.f32 %v873, %v874
        %v876 = vsel %vm860, %v589, 0.0
        %v877 = vadd.f32 %v875, %v876
        %v878 = vsel %vm860, %v590, 0.0
        %v879 = vadd.f32 %v877, %v878
        %v880 = vsel %vm860, %v591, 0.0
        %v881 = vadd.f32 %v879, %v880
        %v882 = vsel %vm860, %v592, 0.0
        %v883 = vadd.f32 %v881, %v882
        %v884 = vsel %vm860, %v593, 0.0
        %v885 = vadd.f32 %v883, %v884
        %v886 = vsel %vm860, %v594, 0.0
        %v887 = vadd.f32 %v885, %v886
        %v888 = vsel %vm860, %v595, 0.0
        %v889 = vadd.f32 %v887, %v888
        %v890 = vsel %vm860, %v596, 0.0
        %v891 = vadd.f32 %v889, %v890
        %v892 = vsel %vm860, %v597, 0.0
        %v893 = vadd.f32 %v891, %v892
        %v894 = vsel %vm860, %v598, 0.0
        %v895 = vadd.f32 %v893, %v894
        %v896 = vsel %vm860, %v599, 0.0
        %v897 = vadd.f32 %v895, %v896
        %v898 = vsel %vm860, %v600, 0.0
        %v899 = vadd.f32 %v897, %v898
        %v900 = vsel %vm860, %v601, 0.0
        %v901 = vadd.f32 %v899, %v900
        %v902 = vsel %vm860, %v602, 0.0
        %v903 = vadd.f32 %v901, %v902
        %v904 = vsel %vm860, %v603, 0.0
        %v905 = vadd.f32 %v903, %v904
        %v906 = vsel %vm860, %v604, 0.0
        %v907 = vadd.f32 %v905, %v906
        %v908 = vsel %vm860, %v605, 0.0
        %v909 = vadd.f32 %v907, %v908
        %v910 = vsel %vm860, %v606, 0.0
        %v911 = vadd.f32 %v909, %v910
        %v912 = vsel %vm860, %v607, 0.0
        %v913 = vadd.f32 %v911, %v912
        %v914 = vsel %vm860, %v608, 0.0
        %v915 = vadd.f32 %v913, %v914
        %v916 = vsel %vm860, %v609, 0.0
        %v917 = vadd.f32 %v915, %v916
        %v918 = vsel %vm860, %v610, 0.0
        %v919 = vadd.f32 %v917, %v918
        %v920 = vsel %vm860, %v611, 0.0
        %v921 = vadd.f32 %v919, %v920
        %v922 = vsel %vm860, %v612, 0.0
        %v923 = vadd.f32 %v921, %v922
        %924 = vadd.xlane.f32.xlu0 %v923
        %v925 = vpop.xlane.xlu0 %924
        %v926 = vrot.slane %v925, 4
        %v927 = vadd.f32 %v925, %v926
        %v928 = vrot.slane %v927, 2
        %v929 = vadd.f32 %v927, %v928
        %v930 = vrot.slane %v929, 1
        %v931 = vadd.f32 %v929, %v930
        %s932 = vtos %v931
        %v933 = vstv %s932
        %v934 = vadd.f32 %v859, %v933
        %vm935 = vcmask 0
        %936 = vst.msk [vmem:[#allocation2] sm:$0x1] %vm935, %v934
        %v937 = vld [vmem:[#allocation3] sm:$0x1]
        %v938 = vmul.f32 %v581, %v581
        %v939 = vmul.f32 %v582, %v582
        %v940 = vmul.f32 %v583, %v583
        %v941 = vmul.f32 %v584, %v584
        %v942 = vmul.f32 %v585, %v585
        %v943 = vmul.f32 %v586, %v586
        %v944 = vmul.f32 %v587, %v587
        %v945 = vmul.f32 %v588, %v588
        %v946 = vmul.f32 %v589, %v589
        %v947 = vmul.f32 %v590, %v590
        %v948 = vmul.f32 %v591, %v591
        %v949 = vmul.f32 %v592, %v592
        %v950 = vmul.f32 %v593, %v593
        %v951 = vmul.f32 %v594, %v594
        %v952 = vmul.f32 %v595, %v595
        %v953 = vmul.f32 %v596, %v596
        %v954 = vmul.f32 %v597, %v597
        %v955 = vmul.f32 %v598, %v598
        %v956 = vmul.f32 %v599, %v599
        %v957 = vmul.f32 %v600, %v600
        %v958 = vmul.f32 %v601, %v601
        %v959 = vmul.f32 %v602, %v602
        %v960 = vmul.f32 %v603, %v603
        %v961 = vmul.f32 %v604, %v604
        %v962 = vmul.f32 %v605, %v605
        %v963 = vmul.f32 %v606, %v606
        %v964 = vmul.f32 %v607, %v607
        %v965 = vmul.f32 %v608, %v608
        %v966 = vmul.f32 %v609, %v609
        %v967 = vmul.f32 %v610, %v610
        %v968 = vmul.f32 %v611, %v611
        %v969 = vmul.f32 %v612, %v612
        %v970 = vsel %vm860, %v938, 0.0
        %v971 = vsel %vm860, %v939, 0.0
        %v972 = vadd.f32 %v970, %v971
        %v973 = vsel %vm860, %v940, 0.0
        %v974 = vadd.f32 %v972, %v973
        %v975 = vsel %vm860, %v941, 0.0
        %v976 = vadd.f32 %v974, %v975
        %v977 = vsel %vm860, %v942, 0.0
        %v978 = vadd.f32 %v976, %v977
        %v979 = vsel %vm860, %v943, 0.0
        %v980 = vadd.f32 %v978, %v979
        %v981 = vsel %vm860, %v944, 0.0
        %v982 = vadd.f32 %v980, %v981
        %v983 = vsel %vm860, %v945, 0.0
        %v984 = vadd.f32 %v982, %v983
        %v985 = vsel %vm860, %v946, 0.0
        %v986 = vadd.f32 %v984, %v985
        %v987 = vsel %vm860, %v947, 0.0
        %v988 = vadd.f32 %v986, %v987
        %v989 = vsel %vm860, %v948, 0.0
        %v990 = vadd.f32 %v988, %v989
        %v991 = vsel %vm860, %v949, 0.0
        %v992 = vadd.f32 %v990, %v991
        %v993 = vsel %vm860, %v950, 0.0
        %v994 = vadd.f32 %v992, %v993
        %v995 = vsel %vm860, %v951, 0.0
        %v996 = vadd.f32 %v994, %v995
        %v997 = vsel %vm860, %v952, 0.0
        %v998 = vadd.f32 %v996, %v997
        %v999 = vsel %vm860, %v953, 0.0
        %v1000 = vadd.f32 %v998, %v999
        %v1001 = vsel %vm860, %v954, 0.0
        %v1002 = vadd.f32 %v1000, %v1001
        %v1003 = vsel %vm860, %v955, 0.0
        %v1004 = vadd.f32 %v1002, %v1003
        %v1005 = vsel %vm860, %v956, 0.0
        %v1006 = vadd.f32 %v1004, %v1005
        %v1007 = vsel %vm860, %v957, 0.0
        %v1008 = vadd.f32 %v1006, %v1007
        %v1009 = vsel %vm860, %v958, 0.0
        %v1010 = vadd.f32 %v1008, %v1009
        %v1011 = vsel %vm860, %v959, 0.0
        %v1012 = vadd.f32 %v1010, %v1011
        %v1013 = vsel %vm860, %v960, 0.0
        %v1014 = vadd.f32 %v1012, %v1013
        %v1015 = vsel %vm860, %v961, 0.0
        %v1016 = vadd.f32 %v1014, %v1015
        %v1017 = vsel %vm860, %v962, 0.0
        %v1018 = vadd.f32 %v1016, %v1017
        %v1019 = vsel %vm860, %v963, 0.0
        %v1020 = vadd.f32 %v1018, %v1019
        %v1021 = vsel %vm860, %v964, 0.0
        %v1022 = vadd.f32 %v1020, %v1021
        %v1023 = vsel %vm860, %v965, 0.0
        %v1024 = vadd.f32 %v1022, %v1023
        %v1025 = vsel %vm860, %v966, 0.0
        %v1026 = vadd.f32 %v1024, %v1025
        %v1027 = vsel %vm860, %v967, 0.0
        %v1028 = vadd.f32 %v1026, %v1027
        %v1029 = vsel %vm860, %v968, 0.0
        %v1030 = vadd.f32 %v1028, %v1029
        %v1031 = vsel %vm860, %v969, 0.0
        %v1032 = vadd.f32 %v1030, %v1031
        %1033 = vadd.xlane.f32.xlu0 %v1032
        %v1034 = vpop.xlane.xlu0 %1033
        %v1035 = vrot.slane %v1034, 4
        %v1036 = vadd.f32 %v1034, %v1035
        %v1037 = vrot.slane %v1036, 2
        %v1038 = vadd.f32 %v1036, %v1037
        %v1039 = vrot.slane %v1038, 1
        %v1040 = vadd.f32 %v1038, %v1039
        %s1041 = vtos %v1040
        %v1042 = vstv %s1041
        %v1043 = vadd.f32 %v937, %v1042
        %1044 = vst.msk [vmem:[#allocation3] sm:$0x1] %vm935, %v1043
        %v1045 = vld [vmem:[#allocation4] sm:$0x1]
        %vm1046 = vcmask 23552
        %v1047 = vsel %vm1046, %v827, 0.0
        %v1048 = vsel %vm1046, %v828, 0.0
        %v1049 = vadd.f32 %v1047, %v1048
        %v1050 = vsel %vm1046, %v829, 0.0
        %v1051 = vadd.f32 %v1049, %v1050
        %v1052 = vsel %vm1046, %v830, 0.0
        %v1053 = vadd.f32 %v1051, %v1052
        %v1054 = vsel %vm1046, %v831, 0.0
        %v1055 = vadd.f32 %v1053, %v1054
        %v1056 = vsel %vm1046, %v832, 0.0
        %v1057 = vadd.f32 %v1055, %v1056
        %v1058 = vsel %vm1046, %v833, 0.0
        %v1059 = vadd.f32 %v1057, %v1058
        %v1060 = vsel %vm1046, %v834, 0.0
        %v1061 = vadd.f32 %v1059, %v1060
        %v1062 = vsel %vm1046, %v835, 0.0
        %v1063 = vadd.f32 %v1061, %v1062
        %v1064 = vsel %vm1046, %v836, 0.0
        %v1065 = vadd.f32 %v1063, %v1064
        %v1066 = vsel %vm1046, %v837, 0.0
        %v1067 = vadd.f32 %v1065, %v1066
        %v1068 = vsel %vm1046, %v838, 0.0
        %v1069 = vadd.f32 %v1067, %v1068
        %v1070 = vsel %vm1046, %v839, 0.0
        %v1071 = vadd.f32 %v1069, %v1070
        %v1072 = vsel %vm1046, %v840, 0.0
        %v1073 = vadd.f32 %v1071, %v1072
        %v1074 = vsel %vm1046, %v841, 0.0
        %v1075 = vadd.f32 %v1073, %v1074
        %v1076 = vsel %vm1046, %v842, 0.0
        %v1077 = vadd.f32 %v1075, %v1076
        %v1078 = vsel %vm1046, %v843, 0.0
        %v1079 = vadd.f32 %v1077, %v1078
        %v1080 = vsel %vm1046, %v844, 0.0
        %v1081 = vadd.f32 %v1079, %v1080
        %v1082 = vsel %vm1046, %v845, 0.0
        %v1083 = vadd.f32 %v1081, %v1082
        %v1084 = vsel %vm1046, %v846, 0.0
        %v1085 = vadd.f32 %v1083, %v1084
        %v1086 = vsel %vm1046, %v847, 0.0
        %v1087 = vadd.f32 %v1085, %v1086
        %v1088 = vsel %vm1046, %v848, 0.0
        %v1089 = vadd.f32 %v1087, %v1088
        %v1090 = vsel %vm1046, %v849, 0.0
        %v1091 = vadd.f32 %v1089, %v1090
        %v1092 = vsel %vm1046, %v850, 0.0
        %v1093 = vadd.f32 %v1091, %v1092
        %v1094 = vsel %vm1046, %v851, 0.0
        %v1095 = vadd.f32 %v1093, %v1094
        %v1096 = vsel %vm1046, %v852, 0.0
        %v1097 = vadd.f32 %v1095, %v1096
        %v1098 = vsel %vm1046, %v853, 0.0
        %v1099 = vadd.f32 %v1097, %v1098
        %v1100 = vsel %vm1046, %v854, 0.0
        %v1101 = vadd.f32 %v1099, %v1100
        %v1102 = vsel %vm1046, %v855, 0.0
        %v1103 = vadd.f32 %v1101, %v1102
        %v1104 = vsel %vm1046, %v856, 0.0
        %v1105 = vadd.f32 %v1103, %v1104
        %v1106 = vsel %vm1046, %v857, 0.0
        %v1107 = vadd.f32 %v1105, %v1106
        %v1108 = vsel %vm1046, %v858, 0.0
        %v1109 = vadd.f32 %v1107, %v1108
        %1110 = vadd.xlane.f32.xlu0 %v1109
        %v1111 = vpop.xlane.xlu0 %1110
        %v1112 = vrot.slane %v1111, 4
        %v1113 = vadd.f32 %v1111, %v1112
        %v1114 = vrot.slane %v1113, 2
        %v1115 = vadd.f32 %v1113, %v1114
        %v1116 = vrot.slane %v1115, 1
        %v1117 = vadd.f32 %v1115, %v1116
        %s1118 = vtos %v1117
        %v1119 = vstv %s1118
        %v1120 = vadd.f32 %v1045, %v1119
        %1121 = vst.msk [vmem:[#allocation4] sm:$0x1] %vm935, %v1120
        %v1122 = vld [vmem:[#allocation5] sm:$0x1]
        %v1123 = vmul.f32 %v827, %v827
        %v1124 = vmul.f32 %v828, %v828
        %v1125 = vmul.f32 %v829, %v829
        %v1126 = vmul.f32 %v830, %v830
        %v1127 = vmul.f32 %v831, %v831
        %v1128 = vmul.f32 %v832, %v832
        %v1129 = vmul.f32 %v833, %v833
        %v1130 = vmul.f32 %v834, %v834
        %v1131 = vmul.f32 %v835, %v835
        %v1132 = vmul.f32 %v836, %v836
        %v1133 = vmul.f32 %v837, %v837
        %v1134 = vmul.f32 %v838, %v838
        %v1135 = vmul.f32 %v839, %v839
        %v1136 = vmul.f32 %v840, %v840
        %v1137 = vmul.f32 %v841, %v841
        %v1138 = vmul.f32 %v842, %v842
        %v1139 = vmul.f32 %v843, %v843
        %v1140 = vmul.f32 %v844, %v844
        %v1141 = vmul.f32 %v845, %v845
        %v1142 = vmul.f32 %v846, %v846
        %v1143 = vmul.f32 %v847, %v847
        %v1144 = vmul.f32 %v848, %v848
        %v1145 = vmul.f32 %v849, %v849
        %v1146 = vmul.f32 %v850, %v850
        %v1147 = vmul.f32 %v851, %v851
        %v1148 = vmul.f32 %v852, %v852
        %v1149 = vmul.f32 %v853, %v853
        %v1150 = vmul.f32 %v854, %v854
        %v1151 = vmul.f32 %v855, %v855
        %v1152 = vmul.f32 %v856, %v856
        %v1153 = vmul.f32 %v857, %v857
        %v1154 = vmul.f32 %v858, %v858
        %v1155 = vsel %vm1046, %v1123, 0.0
        %v1156 = vsel %vm1046, %v1124, 0.0
        %v1157 = vadd.f32 %v1155, %v1156
        %v1158 = vsel %vm1046, %v1125, 0.0
        %v1159 = vadd.f32 %v1157, %v1158
        %v1160 = vsel %vm1046, %v1126, 0.0
        %v1161 = vadd.f32 %v1159, %v1160
        %v1162 = vsel %vm1046, %v1127, 0.0
        %v1163 = vadd.f32 %v1161, %v1162
        %v1164 = vsel %vm1046, %v1128, 0.0
        %v1165 = vadd.f32 %v1163, %v1164
        %v1166 = vsel %vm1046, %v1129, 0.0
        %v1167 = vadd.f32 %v1165, %v1166
        %v1168 = vsel %vm1046, %v1130, 0.0
        %v1169 = vadd.f32 %v1167, %v1168
        %v1170 = vsel %vm1046, %v1131, 0.0
        %v1171 = vadd.f32 %v1169, %v1170
        %v1172 = vsel %vm1046, %v1132, 0.0
        %v1173 = vadd.f32 %v1171, %v1172
        %v1174 = vsel %vm1046, %v1133, 0.0
        %v1175 = vadd.f32 %v1173, %v1174
        %v1176 = vsel %vm1046, %v1134, 0.0
        %v1177 = vadd.f32 %v1175, %v1176
        %v1178 = vsel %vm1046, %v1135, 0.0
        %v1179 = vadd.f32 %v1177, %v1178
        %v1180 = vsel %vm1046, %v1136, 0.0
        %v1181 = vadd.f32 %v1179, %v1180
        %v1182 = vsel %vm1046, %v1137, 0.0
        %v1183 = vadd.f32 %v1181, %v1182
        %v1184 = vsel %vm1046, %v1138, 0.0
        %v1185 = vadd.f32 %v1183, %v1184
        %v1186 = vsel %vm1046, %v1139, 0.0
        %v1187 = vadd.f32 %v1185, %v1186
        %v1188 = vsel %vm1046, %v1140, 0.0
        %v1189 = vadd.f32 %v1187, %v1188
        %v1190 = vsel %vm1046, %v1141, 0.0
        %v1191 = vadd.f32 %v1189, %v1190
        %v1192 = vsel %vm1046, %v1142, 0.0
        %v1193 = vadd.f32 %v1191, %v1192
        %v1194 = vsel %vm1046, %v1143, 0.0
        %v1195 = vadd.f32 %v1193, %v1194
        %v1196 = vsel %vm1046, %v1144, 0.0
        %v1197 = vadd.f32 %v1195, %v1196
        %v1198 = vsel %vm1046, %v1145, 0.0
        %v1199 = vadd.f32 %v1197, %v1198
        %v1200 = vsel %vm1046, %v1146, 0.0
        %v1201 = vadd.f32 %v1199, %v1200
        %v1202 = vsel %vm1046, %v1147, 0.0
        %v1203 = vadd.f32 %v1201, %v1202
        %v1204 = vsel %vm1046, %v1148, 0.0
        %v1205 = vadd.f32 %v1203, %v1204
        %v1206 = vsel %vm1046, %v1149, 0.0
        %v1207 = vadd.f32 %v1205, %v1206
        %v1208 = vsel %vm1046, %v1150, 0.0
        %v1209 = vadd.f32 %v1207, %v1208
        %v1210 = vsel %vm1046, %v1151, 0.0
        %v1211 = vadd.f32 %v1209, %v1210
        %v1212 = vsel %vm1046, %v1152, 0.0
        %v1213 = vadd.f32 %v1211, %v1212
        %v1214 = vsel %vm1046, %v1153, 0.0
        %v1215 = vadd.f32 %v1213, %v1214
        %v1216 = vsel %vm1046, %v1154, 0.0
        %v1217 = vadd.f32 %v1215, %v1216
        %1218 = vadd.xlane.f32.xlu0 %v1217
        %v1219 = vpop.xlane.xlu0 %1218
        %v1220 = vrot.slane %v1219, 4
        %v1221 = vadd.f32 %v1219, %v1220
        %v1222 = vrot.slane %v1221, 2
        %v1223 = vadd.f32 %v1221, %v1222
        %v1224 = vrot.slane %v1223, 1
        %v1225 = vadd.f32 %v1223, %v1224
        %s1226 = vtos %v1225
        %v1227 = vstv %s1226
        %v1228 = vadd.f32 %v1122, %v1227
        %1229 = vst.msk [vmem:[#allocation5] sm:$0x1] %vm935, %v1228
        // Predicated region
        $region41: #{tpu_custom_call.1} parent=35 // pred_check
          _
        $region42: #{tpu_custom_call.1} parent=35 // pred_check_branch
          %1231 = sbr.rel (%p358) target = $region44
        $region43: #{tpu_custom_call.1} parent=35 // pred_region
          %v1232 = vld [vmem:[#allocation3] sm:$0x1]
          %v1233 = vld [vmem:[#allocation2] sm:$0x1]
          %v1234 = vmul.f32 %v1233, %v1233
          %v1235 = vmul.f32 %v1234, 2.0345053e-05
          %v1236 = vsub.f32 %v1232, %v1235
          %v1237 = vmul.f32 %v1236, 2.0345466e-05
          %v1238 = vld [vmem:[#allocation5] sm:$0x1]
          %v1239 = vld [vmem:[#allocation4] sm:$0x1]
          %v1240 = vmul.f32 %v1239, %v1239
          %v1241 = vmul.f32 %v1240, 0.00016276042
          %v1242 = vsub.f32 %v1238, %v1241
          %v1243 = vmul.f32 %v1242, 0.0001627869
          %v1244 = vrsqrt.pop %v1237
          %v1245 = vmul.f32 %v1237, %v1244
          %vm1246 = vcmp.eq.f32.partialorder %v1237, inf
          %v1247 = vsel %vm1246, %v1237, %v1245
          %vm1248 = vcmp.eq.f32.partialorder %v1237, 0.0
          %v1249 = vand.u32 %v1237, 2147483648
          %v1250 = vsel %vm1248, %v1249, %v1247
          %1251 = vst.msk [vmem:[#allocation6] sm:$0x1] %vm935, %v1250
          %v1252 = vrsqrt.pop %v1243
          %v1253 = vmul.f32 %v1243, %v1252
          %vm1254 = vcmp.eq.f32.partialorder %v1243, inf
          %v1255 = vsel %vm1254, %v1243, %v1253
          %vm1256 = vcmp.eq.f32.partialorder %v1243, 0.0
          %v1257 = vand.u32 %v1243, 2147483648
          %v1258 = vsel %vm1256, %v1257, %v1255
          %1259 = vst.msk [vmem:[#allocation8] sm:$0x1] %vm935, %v1258
        $region44: #{tpu_custom_call.1} parent=35 // pred_fallthru
          _
        // Predicated region
        $region45: #{tpu_custom_call.1} parent=35 // pred_check
          %p1260 = pneg %p156
        $region46: #{tpu_custom_call.1} parent=35 // pred_check_branch
          %1262 = sbr.rel (%p1260) target = $region48
        $region47: #{tpu_custom_call.1} parent=35 // pred_region
          %s1264 = ssub.s32 16, 16
          %1265 = vsyncadd [#allocation7], %s1264
          %s1267 = sshll.u32 [#allocation6], 4
          %s1268 = int_to_ptr.vmem [resolvable:$true] %s1267
          %1270 = dma.vmem_to_hbm [thread:$0]  %s1268, 16, %s4, [#allocation7]
        $region48: #{tpu_custom_call.1} parent=35 // pred_fallthru
          _
        // Predicated region
        $region49: #{tpu_custom_call.1} parent=35 // pred_check
          %p1271 = pneg %p177
        $region50: #{tpu_custom_call.1} parent=35 // pred_check_branch
          %1273 = sbr.rel (%p1271) target = $region52
        $region51: #{tpu_custom_call.1} parent=35 // pred_region
          %s1275 = ssub.s32 16, 16
          %1276 = vsyncadd [#allocation9], %s1275
          %s1278 = sshll.u32 [#allocation8], 4
          %s1279 = int_to_ptr.vmem [resolvable:$true] %s1278
          %1281 = dma.vmem_to_hbm [thread:$0]  %s1279, 16, %s5, [#allocation9]
        $region52: #{tpu_custom_call.1} parent=35 // pred_fallthru
          _
        // Predicated region
        $region53: #{tpu_custom_call.1} parent=35 // pred_check
          %p1282 = pneg %p156
        $region54: #{tpu_custom_call.1} parent=35 // pred_check_branch
          %1284 = sbr.rel (%p1282) target = $region56
        $region55: #{tpu_custom_call.1} parent=35 // pred_region
          %1285 = dma.done [#allocation7], 16
        $region56: #{tpu_custom_call.1} parent=35 // pred_fallthru
          _
        // Predicated region
        $region57: #{tpu_custom_call.1} parent=35 // pred_check
          %p1286 = pneg %p177
        $region58: #{tpu_custom_call.1} parent=35 // pred_check_branch
          %1288 = sbr.rel (%p1286) target = $region60
        $region59: #{tpu_custom_call.1} parent=35 // pred_region
          %1289 = dma.done [#allocation9], 16
        $region60: #{tpu_custom_call.1} parent=35 // pred_fallthru
          _
      $region36: #{tpu_custom_call.1} parent=5 // pred_fallthru
        _
      %p1290 = scmp.le.s32.totalorder 2, %s14
      // Predicated region
      $region61: #{tpu_custom_call.1} parent=5 // pred_check
        %p1291 = pneg %p1290
      $region62: #{tpu_custom_call.1} parent=5 // pred_check_branch
        %1293 = sbr.rel (%p1291) target = $region64
      $region63: #{tpu_custom_call.1} parent=5 // pred_region
        %s1294 = ssub.s32 %s14, 2
      $region64: #{tpu_custom_call.1} parent=5 // pred_fallthru
        _
    $region6: #{tpu_custom_call.1} parent=1 // loop_footer
      %s18 = sadd.s32 1, %s14
    $region7: #{tpu_custom_call.1} parent=1 // loop_footer_branch
      %13 = sbr.rel target = $region3
    $region8: #{tpu_custom_call.1} parent=1 // loop_exit
      _
    %1295 = vsyncpa [#allocation7], 1
    %s1296 = scalar_lea.sflag [#allocation7], 1
    %1297 = vsyncpa %s1296, 1
    %1298 = vsyncpa [#allocation9], 1

</llo_original>
